<compile_context>
chip_gen: v7x
topology: tpu7x:2x2x1
jax: 0.10.0
libtpu: 0.0.40
codegen_flags: <defaults>
</compile_context>

<pallas_src>
import math

import jax
import jax.numpy as jnp
from jax import lax
from jax.experimental import pallas as pl
from jax.experimental.pallas import tpu as pltpu

# ---------------- configuration (small, consistent with the module) -----------
N = 8              # batch size
E = 32             # d_model
H = 4              # attention heads
DH = E // H        # per-head dim
S0 = 8             # length of the initial recurrent state
T_STEPS = 8        # timesteps processed per pallas_call (grid size)
S_MAX = S0 + T_STEPS   # final state length (multiple of 8 -> clean sublane layout)
F = 4 * E          # d_ff (default 4*d_model)
EPS = 1e-5         # LayerNorm eps (PyTorch default)
SCALE = 1.0 / math.sqrt(DH)

# rows of the packed (6, E) vector input
_BO, _B2, _G1, _BE1, _G2, _BE2 = range(6)


def _layer_norm(x, gamma, beta):
    mu = jnp.mean(x, axis=-1, keepdims=True)
    var = jnp.mean((x - mu) ** 2, axis=-1, keepdims=True)
    return (x - mu) * lax.rsqrt(var + EPS) * gamma + beta


# ------------------------------- kernel ---------------------------------------
def encoder_layer_kernel(
    x_ref,                  # (N, E)          current timestep (squeezed block)
    k0_ref, v0_ref,         # (S0, N, E)      initial recurrent state (time-major)
    sel_ref, selT_ref,      # (E, H), (H, E)  block-diagonal head selectors
    wqkv_ref, bqkv_ref,     # (E, 3E), (1, 3E)
    wo_ref,                 # (E, E)
    w1_ref, b1_ref,         # (E, F), (1, F)
    w2_ref,                 # (F, E)
    vecs_ref,               # (6, E)          [bo, b2, g1, be1, g2, be2]
    out_ref,                # (N, E)          output for this timestep
    kmem_ref, vmem_ref,     # (S_MAX, N, E)   resident K/V memory (accumulator outputs)
):
    t = pl.program_id(0)

    # --- one-time init of the recurrent memory (tail zeroed so masked math is clean)
    @pl.when(t == 0)
    def _():
        kmem_ref[:S0] = k0_ref[...]
        vmem_ref[:S0] = v0_ref[...]
        kmem_ref[S0:] = jnp.zeros((S_MAX - S0, N, E), jnp.float32)
        vmem_ref[S0:] = jnp.zeros((S_MAX - S0, N, E), jnp.float32)

    x = x_ref[...]
    sel = sel_ref[...]
    selT = selT_ref[...]

    # --- fused q/k/v projection: one MXU push of (N,E)x(E,3E) ---
    qkv = jnp.dot(x, wqkv_ref[...], preferred_element_type=jnp.float32) + bqkv_ref[...]
    q = qkv[:, 0 * E:1 * E] * SCALE
    k = qkv[:, 1 * E:2 * E]
    v = qkv[:, 2 * E:3 * E]

    L = S0 + t                      # number of valid cached timesteps before this one
    kmem = kmem_ref[...]            # (S_MAX, N, E)
    vmem = vmem_ref[...]

    # --- per-head scores against the cached memory, vectorized over heads ---
    prod = q[None, :, :] * kmem                                   # (S_MAX, N, E)
    scores_mem = jnp.dot(prod.reshape(S_MAX * N, E), sel,
                         preferred_element_type=jnp.float32).reshape(S_MAX, N, H)
    s_idx = lax.broadcasted_iota(jnp.int32, (S_MAX, N, H), 0)
    scores_mem = jnp.where(s_idx < L, scores_mem, -jnp.inf)
    score_new = jnp.dot(q * k, sel, preferred_element_type=jnp.float32)   # (N, H)

    # --- softmax over (cached positions ++ current timestep) ---
    m = jnp.maximum(jnp.max(scores_mem, axis=0), score_new)       # (N, H)
    p_mem = jnp.exp(scores_mem - m[None, :, :])                   # 0 at masked slots
    p_new = jnp.exp(score_new - m)                                # (N, H)
    l = jnp.sum(p_mem, axis=0) + p_new                            # (N, H)
    inv_l = pl.reciprocal(l, approx=True)                         # EUP slot, ~free

    # --- expand head weights back to E lanes (block-diagonal) + weighted value sum ---
    p_mem_e = jnp.dot(p_mem.reshape(S_MAX * N, H), selT,
                      preferred_element_type=jnp.float32).reshape(S_MAX, N, E)
    inv_l_e = jnp.dot(inv_l, selT, preferred_element_type=jnp.float32)          # (N, E)
    w_new_e = jnp.dot(p_new * inv_l, selT, preferred_element_type=jnp.float32)  # (N, E)
    attn = jnp.sum(p_mem_e * vmem, axis=0) * inv_l_e + v * w_new_e              # (N, E)

    # --- append this step's key/value (whole-tile store on the un-tiled major axis) ---
    kmem_ref[pl.ds(L, 1)] = k[None, :, :]
    vmem_ref[pl.ds(L, 1)] = v[None, :, :]

    bo, b2 = vecs_ref[_BO:_BO + 1, :], vecs_ref[_B2:_B2 + 1, :]
    g1, be1 = vecs_ref[_G1:_G1 + 1, :], vecs_ref[_BE1:_BE1 + 1, :]
    g2, be2 = vecs_ref[_G2:_G2 + 1, :], vecs_ref[_BE2:_BE2 + 1, :]

    # --- output projection + residual + norm1 (dropout = identity in eval mode) ---
    x2 = jnp.dot(attn, wo_ref[...], preferred_element_type=jnp.float32) + bo
    xn = _layer_norm(x + x2, g1, be1)

    # --- feed forward (relu) + residual + norm2 ---
    y = jnp.dot(xn, w1_ref[...], preferred_element_type=jnp.float32) + b1_ref[...]
    y = jnp.maximum(y, 0.0)
    y = jnp.dot(y, w2_ref[...], preferred_element_type=jnp.float32) + b2
    out_ref[...] = _layer_norm(xn + y, g2, be2)


# ------------------------------- wrapper ---------------------------------------
def encoder_layer(x_seq, k_state, v_state, params):
    assert x_seq.shape == (T_STEPS, N, E)
    assert k_state.shape == (N, S0, E) and v_state.shape == (N, S0, E)

    # pack weights / small vectors (fewer tiny DMAs)
    wqkv = jnp.concatenate([params["wq"], params["wk"], params["wv"]], axis=1)  # (E, 3E)
    bqkv = jnp.concatenate([params["bq"], params["bk"], params["bv"]], axis=1)  # (1, 3E)
    vecs = jnp.concatenate([params["bo"], params["b2"], params["g1"],
                            params["be1"], params["g2"], params["be2"]], axis=0)  # (6, E)
    sel = (jnp.arange(E)[:, None] // DH == jnp.arange(H)[None, :]).astype(jnp.float32)
    selT = sel.T

    # time-major recurrent state so the per-step append is a whole-tile store
    k0_t = jnp.transpose(k_state, (1, 0, 2))   # (S0, N, E)
    v0_t = jnp.transpose(v_state, (1, 0, 2))

    def fixed(shape):
        return pl.BlockSpec(shape, lambda t: (0,) * len(shape))

    out_seq, k_new_t, v_new_t = pl.pallas_call(
        encoder_layer_kernel,
        grid=(T_STEPS,),
        in_specs=[
            pl.BlockSpec((None, N, E), lambda t: (t, 0, 0)),    # x_seq block per step
            fixed((S0, N, E)), fixed((S0, N, E)),               # k0, v0
            fixed((E, H)), fixed((H, E)),                       # sel, selT
            fixed((E, 3 * E)), fixed((1, 3 * E)),               # wqkv, bqkv
            fixed((E, E)),                                      # wo
            fixed((E, F)), fixed((1, F)),                       # w1, b1
            fixed((F, E)),                                      # w2
            fixed((6, E)),                                      # packed bias/gain vectors
        ],
        out_specs=(
            pl.BlockSpec((None, N, E), lambda t: (t, 0, 0)),    # per-step output
            fixed((S_MAX, N, E)),                               # K memory (resident)
            fixed((S_MAX, N, E)),                               # V memory (resident)
        ),
        out_shape=(
            jax.ShapeDtypeStruct((T_STEPS, N, E), jnp.float32),
            jax.ShapeDtypeStruct((S_MAX, N, E), jnp.float32),
            jax.ShapeDtypeStruct((S_MAX, N, E), jnp.float32),
        ),
        compiler_params=pltpu.CompilerParams(
            dimension_semantics=("arbitrary",)),   # recurrent time axis carries state
    )(x_seq, k0_t, v0_t, sel, selT, wqkv, bqkv,
      params["wo"], params["w1"], params["b1"], params["w2"], vecs)

    return (out_seq,
            jnp.transpose(k_new_t, (1, 0, 2)),
            jnp.transpose(v_new_t, (1, 0, 2)))


# --------------------------- pure-JAX reference --------------------------------
def reference(x_seq, k_state, v_state, p):
    k_mem, v_mem = k_state, v_state
    outs = []
    for t in range(x_seq.shape[0]):
        x = x_seq[t]
        q = x @ p["wq"] + p["bq"]
        k = x @ p["wk"] + p["bk"]
        v = x @ p["wv"] + p["bv"]
        k_mem = jnp.concatenate([k_mem, k[:, None, :]], axis=1)
        v_mem = jnp.concatenate([v_mem, v[:, None, :]], axis=1)
        s = k_mem.shape[1]
        qh = q.reshape(N, H, DH)
        kh = k_mem.reshape(N, s, H, DH)
        vh = v_mem.reshape(N, s, H, DH)
        scores = jnp.einsum("nhd,nshd->nhs", qh, kh) * SCALE
        w = jax.nn.softmax(scores, axis=-1)
        attn = jnp.einsum("nhs,nshd->nhd", w, vh).reshape(N, E)
        x2 = attn @ p["wo"] + p["bo"]
        xn = _layer_norm(x + x2, p["g1"], p["be1"])
        y = jnp.maximum(xn @ p["w1"] + p["b1"], 0.0)
        y = y @ p["w2"] + p["b2"]
        outs.append(_layer_norm(xn + y, p["g2"], p["be2"]))
    return jnp.stack(outs), k_mem, v_mem


# ----------------------------------- main ---------------------------------------
if __name__ == "__main__":
    keys = jax.random.split(jax.random.PRNGKey(0), 19)

    def nrm(k_, shape, scale=0.05):
        return (scale * jax.random.normal(k_, shape)).astype(jnp.float32)

    params = {
        "wq": nrm(keys[0], (E, E)), "bq": nrm(keys[1], (1, E)),
        "wk": nrm(keys[2], (E, E)), "bk": nrm(keys[3], (1, E)),
        "wv": nrm(keys[4], (E, E)), "bv": nrm(keys[5], (1, E)),
        "wo": nrm(keys[6], (E, E)), "bo": nrm(keys[7], (1, E)),
        "w1": nrm(keys[8], (E, F)), "b1": nrm(keys[9], (1, F)),
        "w2": nrm(keys[10], (F, E)), "b2": nrm(keys[11], (1, E)),
        "g1": (1.0 + 0.1 * jax.random.normal(keys[12], (1, E))).astype(jnp.float32),
        "be1": nrm(keys[13], (1, E)),
        "g2": (1.0 + 0.1 * jax.random.normal(keys[14], (1, E))).astype(jnp.float32),
        "be2": nrm(keys[15], (1, E)),
    }

    x_seq = jax.random.normal(keys[16], (T_STEPS, N, E), dtype=jnp.float32)
    k_state = jax.random.normal(keys[17], (N, S0, E), dtype=jnp.float32)
    v_state = jax.random.normal(keys[18], (N, S0, E), dtype=jnp.float32)

    out_seq, k_new, v_new = encoder_layer(x_seq, k_state, v_state, params)
    jax.block_until_ready(out_seq)

    ref_out, ref_k, ref_v = reference(x_seq, k_state, v_state, params)
    # output tolerance 1e-3 to accommodate the EUP approximate reciprocal in softmax
    assert jnp.allclose(out_seq, ref_out, atol=1e-3, rtol=1e-3), "output mismatch"
    assert jnp.allclose(k_new, ref_k, atol=1e-4, rtol=1e-4), "k-state mismatch"
    assert jnp.allclose(v_new, ref_v, atol=1e-4, rtol=1e-4), "v-state mismatch"

    print("KERNEL_OK")
</pallas_src>

<mosaic_0001>
module attributes {stable_mosaic.version = 11 : i64} {
  func.func @encoder_layer_kernel(%arg0: i32, %arg1: memref<1x8x32xf32, #tpu.memory_space<vmem>>, %arg2: memref<8x8x32xf32, #tpu.memory_space<vmem>>, %arg3: memref<8x8x32xf32, #tpu.memory_space<vmem>>, %arg4: memref<32x4xf32, #tpu.memory_space<vmem>>, %arg5: memref<4x32xf32, #tpu.memory_space<vmem>>, %arg6: memref<32x96xf32, #tpu.memory_space<vmem>>, %arg7: memref<1x96xf32, #tpu.memory_space<vmem>>, %arg8: memref<32x32xf32, #tpu.memory_space<vmem>>, %arg9: memref<32x128xf32, #tpu.memory_space<vmem>>, %arg10: memref<1x128xf32, #tpu.memory_space<vmem>>, %arg11: memref<128x32xf32, #tpu.memory_space<vmem>>, %arg12: memref<6x32xf32, #tpu.memory_space<vmem>>, %arg13: memref<1x8x32xf32, #tpu.memory_space<vmem>>, %arg14: memref<16x8x32xf32, #tpu.memory_space<vmem>>, %arg15: memref<16x8x32xf32, #tpu.memory_space<vmem>>) attributes {dimension_semantics = [#tpu.dimension_semantics<arbitrary>], iteration_bounds = array<i64: 8>, scalar_prefetch = 0 : i64, scratch_operands = 0 : i64, tpu.core_type = #tpu.core_type<tc>, window_params = [{transform_indices = @transform_0, window_bounds = array<i64: 1, 8, 32>}, {pipeline_mode = #tpu.pipeline_mode<synchronous>, transform_indices = @transform_1, window_bounds = array<i64: 8, 8, 32>}, {pipeline_mode = #tpu.pipeline_mode<synchronous>, transform_indices = @transform_2, window_bounds = array<i64: 8, 8, 32>}, {pipeline_mode = #tpu.pipeline_mode<synchronous>, transform_indices = @transform_3, window_bounds = array<i64: 32, 4>}, {pipeline_mode = #tpu.pipeline_mode<synchronous>, transform_indices = @transform_4, window_bounds = array<i64: 4, 32>}, {pipeline_mode = #tpu.pipeline_mode<synchronous>, transform_indices = @transform_5, window_bounds = array<i64: 32, 96>}, {pipeline_mode = #tpu.pipeline_mode<synchronous>, transform_indices = @transform_6, window_bounds = array<i64: 1, 96>}, {pipeline_mode = #tpu.pipeline_mode<synchronous>, transform_indices = @transform_7, window_bounds = array<i64: 32, 32>}, {pipeline_mode = #tpu.pipeline_mode<synchronous>, transform_indices = @transform_8, window_bounds = array<i64: 32, 128>}, {pipeline_mode = #tpu.pipeline_mode<synchronous>, transform_indices = @transform_9, window_bounds = array<i64: 1, 128>}, {pipeline_mode = #tpu.pipeline_mode<synchronous>, transform_indices = @transform_10, window_bounds = array<i64: 128, 32>}, {pipeline_mode = #tpu.pipeline_mode<synchronous>, transform_indices = @transform_11, window_bounds = array<i64: 6, 32>}, {transform_indices = @transform_12, window_bounds = array<i64: 1, 8, 32>}, {pipeline_mode = #tpu.pipeline_mode<synchronous>, transform_indices = @transform_13, window_bounds = array<i64: 16, 8, 32>}, {pipeline_mode = #tpu.pipeline_mode<synchronous>, transform_indices = @transform_14, window_bounds = array<i64: 16, 8, 32>}]} {
    %c0_i32 = arith.constant 0 : i32
    %0 = arith.cmpi eq, %arg0, %c0_i32 : i32
    %1 = arith.extui %0 : i1 to i32
    %c0_i32_0 = arith.constant 0 : i32
    %2 = arith.cmpi ne, %1, %c0_i32_0 : i32
    scf.if %2 {
      %c0_63 = arith.constant 0 : index
      %c0_64 = arith.constant 0 : index
      %c0_65 = arith.constant 0 : index
      %131 = vector.load %arg2[%c0_63, %c0_64, %c0_65] : memref<8x8x32xf32, #tpu.memory_space<vmem>>, vector<8x8x32xf32>
      %c0_66 = arith.constant 0 : index
      %c0_67 = arith.constant 0 : index
      %c0_68 = arith.constant 0 : index
      %132 = vector.load %arg14[%c0_66, %c0_67, %c0_68] : memref<16x8x32xf32, #tpu.memory_space<vmem>>, vector<8x8x32xf32>
      tpu.vector_store %arg14[%c0_66, %c0_67, %c0_68], %131 {strides = array<i32>} : memref<16x8x32xf32, #tpu.memory_space<vmem>>, vector<8x8x32xf32>,
      %c0_69 = arith.constant 0 : index
      %c0_70 = arith.constant 0 : index
      %c0_71 = arith.constant 0 : index
      %133 = vector.load %arg3[%c0_69, %c0_70, %c0_71] : memref<8x8x32xf32, #tpu.memory_space<vmem>>, vector<8x8x32xf32>
      %c0_72 = arith.constant 0 : index
      %c0_73 = arith.constant 0 : index
      %c0_74 = arith.constant 0 : index
      %134 = vector.load %arg15[%c0_72, %c0_73, %c0_74] : memref<16x8x32xf32, #tpu.memory_space<vmem>>, vector<8x8x32xf32>
      tpu.vector_store %arg15[%c0_72, %c0_73, %c0_74], %133 {strides = array<i32>} : memref<16x8x32xf32, #tpu.memory_space<vmem>>, vector<8x8x32xf32>,
      %cst_75 = arith.constant 0.000000e+00 : f32
      %135 = vector.broadcast %cst_75 : f32 to vector<8x8x32xf32>
      %c8 = arith.constant 8 : index
      %c0_76 = arith.constant 0 : index
      %c0_77 = arith.constant 0 : index
      %136 = vector.load %arg14[%c8, %c0_76, %c0_77] : memref<16x8x32xf32, #tpu.memory_space<vmem>>, vector<8x8x32xf32>
      tpu.vector_store %arg14[%c8, %c0_76, %c0_77], %135 {strides = array<i32>} : memref<16x8x32xf32, #tpu.memory_space<vmem>>, vector<8x8x32xf32>,
      %cst_78 = arith.constant 0.000000e+00 : f32
      %137 = vector.broadcast %cst_78 : f32 to vector<8x8x32xf32>
      %c8_79 = arith.constant 8 : index
      %c0_80 = arith.constant 0 : index
      %c0_81 = arith.constant 0 : index
      %138 = vector.load %arg15[%c8_79, %c0_80, %c0_81] : memref<16x8x32xf32, #tpu.memory_space<vmem>>, vector<8x8x32xf32>
      tpu.vector_store %arg15[%c8_79, %c0_80, %c0_81], %137 {strides = array<i32>} : memref<16x8x32xf32, #tpu.memory_space<vmem>>, vector<8x8x32xf32>,
    } else {
    }
    %c0 = arith.constant 0 : index
    %c0_1 = arith.constant 0 : index
    %c0_2 = arith.constant 0 : index
    %3 = vector.load %arg1[%c0, %c0_1, %c0_2] : memref<1x8x32xf32, #tpu.memory_space<vmem>>, vector<1x8x32xf32>
    %4 = vector.shape_cast %3 : vector<1x8x32xf32> to vector<8x32xf32>
    %c0_3 = arith.constant 0 : index
    %c0_4 = arith.constant 0 : index
    %5 = vector.load %arg4[%c0_3, %c0_4] : memref<32x4xf32, #tpu.memory_space<vmem>>, vector<32x4xf32>
    %c0_5 = arith.constant 0 : index
    %c0_6 = arith.constant 0 : index
    %6 = vector.load %arg5[%c0_5, %c0_6] : memref<4x32xf32, #tpu.memory_space<vmem>>, vector<4x32xf32>
    %c0_7 = arith.constant 0 : index
    %c0_8 = arith.constant 0 : index
    %7 = vector.load %arg6[%c0_7, %c0_8] : memref<32x96xf32, #tpu.memory_space<vmem>>, vector<32x96xf32>
    %cst = arith.constant dense<0.000000e+00> : vector<8x96xf32>
    %8 = tpu.matmul %4, %7, %cst {dimension_numbers = #tpu.dot_dimension_numbers<[1], [0], [0], [1], [0, 0, 1, 1], [], []>} : vector<8x32xf32>, vector<32x96xf32>, vector<8x96xf32> -> vector<8x96xf32>
    %c0_9 = arith.constant 0 : index
    %c0_10 = arith.constant 0 : index
    %9 = vector.load %arg7[%c0_9, %c0_10] : memref<1x96xf32, #tpu.memory_space<vmem>>, vector<1x96xf32>
    %10 = vector.broadcast %9 : vector<1x96xf32> to vector<8x96xf32>
    %11 = arith.addf %8, %10 : vector<8x96xf32>
    %12 = vector.extract_strided_slice %11 {offsets = [0, 0], sizes = [8, 32], strides = [1, 1]} : vector<8x96xf32> to vector<8x32xf32>
    %cst_11 = arith.constant 0.353553385 : f32
    %13 = vector.broadcast %cst_11 : f32 to vector<8x32xf32>
    %14 = arith.mulf %12, %13 : vector<8x32xf32>
    %15 = vector.extract_strided_slice %11 {offsets = [0, 32], sizes = [8, 32], strides = [1, 1]} : vector<8x96xf32> to vector<8x32xf32>
    %16 = vector.extract_strided_slice %11 {offsets = [0, 64], sizes = [8, 32], strides = [1, 1]} : vector<8x96xf32> to vector<8x32xf32>
    %c8_i32 = arith.constant 8 : i32
    %17 = arith.addi %c8_i32, %arg0 : i32
    %c0_12 = arith.constant 0 : index
    %c0_13 = arith.constant 0 : index
    %c0_14 = arith.constant 0 : index
    %18 = vector.load %arg14[%c0_12, %c0_13, %c0_14] : memref<16x8x32xf32, #tpu.memory_space<vmem>>, vector<16x8x32xf32>
    %c0_15 = arith.constant 0 : index
    %c0_16 = arith.constant 0 : index
    %c0_17 = arith.constant 0 : index
    %19 = vector.load %arg15[%c0_15, %c0_16, %c0_17] : memref<16x8x32xf32, #tpu.memory_space<vmem>>, vector<16x8x32xf32>
    %20 = vector.shape_cast %14 : vector<8x32xf32> to vector<1x8x32xf32>
    %21 = vector.broadcast %20 : vector<1x8x32xf32> to vector<16x8x32xf32>
    %22 = arith.mulf %21, %18 : vector<16x8x32xf32>
    %23 = vector.shape_cast %22 : vector<16x8x32xf32> to vector<128x32xf32>
    %cst_18 = arith.constant dense<0.000000e+00> : vector<128x4xf32>
    %24 = tpu.matmul %23, %5, %cst_18 {dimension_numbers = #tpu.dot_dimension_numbers<[1], [0], [0], [1], [0, 0, 1, 1], [], []>} : vector<128x32xf32>, vector<32x4xf32>, vector<128x4xf32> -> vector<128x4xf32>
    %25 = vector.shape_cast %24 : vector<128x4xf32> to vector<16x8x4xf32>
    %26 = tpu.iota {dimensions = array<i32: 0>} : vector<16x8x4xi32>
    %27 = vector.broadcast %17 : i32 to vector<16x8x4xi32>
    %28 = arith.cmpi slt, %26, %27 : vector<16x8x4xi32>
    %cst_19 = arith.constant 0xFF800000 : f32
    %29 = vector.broadcast %cst_19 : f32 to vector<16x8x4xf32>
    %30 = arith.select %28, %25, %29 : vector<16x8x4xi1>, vector<16x8x4xf32>
    %31 = arith.mulf %14, %15 : vector<8x32xf32>
    %cst_20 = arith.constant dense<0.000000e+00> : vector<8x4xf32>
    %32 = tpu.matmul %31, %5, %cst_20 {dimension_numbers = #tpu.dot_dimension_numbers<[1], [0], [0], [1], [0, 0, 1, 1], [], []>} : vector<8x32xf32>, vector<32x4xf32>, vector<8x4xf32> -> vector<8x4xf32>
    %cst_21 = arith.constant dense<0xFF800000> : vector<8x4xf32>
    %33 = vector.multi_reduction <maximumf>, %30, %cst_21 [0] : vector<16x8x4xf32> to vector<8x4xf32>
    %34 = arith.maximumf %33, %32 : vector<8x4xf32>
    %35 = vector.shape_cast %34 : vector<8x4xf32> to vector<1x8x4xf32>
    %36 = vector.broadcast %35 : vector<1x8x4xf32> to vector<16x8x4xf32>
    %37 = arith.subf %30, %36 : vector<16x8x4xf32>
    %38 = math.exp %37 : vector<16x8x4xf32>
    %39 = arith.subf %32, %34 : vector<8x4xf32>
    %40 = math.exp %39 : vector<8x4xf32>
    %cst_22 = arith.constant dense<0.000000e+00> : vector<8x4xf32>
    %41 = vector.multi_reduction <add>, %38, %cst_22 [0] : vector<16x8x4xf32> to vector<8x4xf32>
    %42 = arith.addf %41, %40 : vector<8x4xf32>
    %43 = tpu.reciprocal %42 {approx = true} : vector<8x4xf32> -> vector<8x4xf32>
    %44 = vector.shape_cast %38 : vector<16x8x4xf32> to vector<128x4xf32>
    %cst_23 = arith.constant dense<0.000000e+00> : vector<128x32xf32>
    %45 = tpu.matmul %44, %6, %cst_23 {dimension_numbers = #tpu.dot_dimension_numbers<[1], [0], [0], [1], [0, 0, 1, 1], [], []>} : vector<128x4xf32>, vector<4x32xf32>, vector<128x32xf32> -> vector<128x32xf32>
    %46 = vector.shape_cast %45 : vector<128x32xf32> to vector<16x8x32xf32>
    %cst_24 = arith.constant dense<0.000000e+00> : vector<8x32xf32>
    %47 = tpu.matmul %43, %6, %cst_24 {dimension_numbers = #tpu.dot_dimension_numbers<[1], [0], [0], [1], [0, 0, 1, 1], [], []>} : vector<8x4xf32>, vector<4x32xf32>, vector<8x32xf32> -> vector<8x32xf32>
    %48 = arith.mulf %40, %43 : vector<8x4xf32>
    %cst_25 = arith.constant dense<0.000000e+00> : vector<8x32xf32>
    %49 = tpu.matmul %48, %6, %cst_25 {dimension_numbers = #tpu.dot_dimension_numbers<[1], [0], [0], [1], [0, 0, 1, 1], [], []>} : vector<8x4xf32>, vector<4x32xf32>, vector<8x32xf32> -> vector<8x32xf32>
    %50 = arith.mulf %46, %19 : vector<16x8x32xf32>
    %cst_26 = arith.constant dense<0.000000e+00> : vector<8x32xf32>
    %51 = vector.multi_reduction <add>, %50, %cst_26 [0] : vector<16x8x32xf32> to vector<8x32xf32>
    %52 = arith.mulf %51, %47 : vector<8x32xf32>
    %53 = arith.mulf %16, %49 : vector<8x32xf32>
    %54 = arith.addf %52, %53 : vector<8x32xf32>
    %55 = vector.shape_cast %15 : vector<8x32xf32> to vector<1x8x32xf32>
    %56 = arith.index_cast %17 : i32 to index
    %c0_27 = arith.constant 0 : index
    %c0_28 = arith.constant 0 : index
    %57 = vector.load %arg14[%56, %c0_27, %c0_28] : memref<16x8x32xf32, #tpu.memory_space<vmem>>, vector<1x8x32xf32>
    tpu.vector_store %arg14[%56, %c0_27, %c0_28], %55 {strides = array<i32>} : memref<16x8x32xf32, #tpu.memory_space<vmem>>, vector<1x8x32xf32>,
    %58 = vector.shape_cast %16 : vector<8x32xf32> to vector<1x8x32xf32>
    %59 = arith.index_cast %17 : i32 to index
    %c0_29 = arith.constant 0 : index
    %c0_30 = arith.constant 0 : index
    %60 = vector.load %arg15[%59, %c0_29, %c0_30] : memref<16x8x32xf32, #tpu.memory_space<vmem>>, vector<1x8x32xf32>
    tpu.vector_store %arg15[%59, %c0_29, %c0_30], %58 {strides = array<i32>} : memref<16x8x32xf32, #tpu.memory_space<vmem>>, vector<1x8x32xf32>,
    %c0_31 = arith.constant 0 : index
    %c0_32 = arith.constant 0 : index
    %61 = vector.load %arg12[%c0_31, %c0_32] : memref<6x32xf32, #tpu.memory_space<vmem>>, vector<1x32xf32>
    %c1 = arith.constant 1 : index
    %c0_33 = arith.constant 0 : index
    %62 = vector.load %arg12[%c1, %c0_33] : memref<6x32xf32, #tpu.memory_space<vmem>>, vector<1x32xf32>
    %c2 = arith.constant 2 : index
    %c0_34 = arith.constant 0 : index
    %63 = vector.load %arg12[%c2, %c0_34] : memref<6x32xf32, #tpu.memory_space<vmem>>, vector<1x32xf32>
    %c3 = arith.constant 3 : index
    %c0_35 = arith.constant 0 : index
    %64 = vector.load %arg12[%c3, %c0_35] : memref<6x32xf32, #tpu.memory_space<vmem>>, vector<1x32xf32>
    %c4 = arith.constant 4 : index
    %c0_36 = arith.constant 0 : index
    %65 = vector.load %arg12[%c4, %c0_36] : memref<6x32xf32, #tpu.memory_space<vmem>>, vector<1x32xf32>
    %c5 = arith.constant 5 : index
    %c0_37 = arith.constant 0 : index
    %66 = vector.load %arg12[%c5, %c0_37] : memref<6x32xf32, #tpu.memory_space<vmem>>, vector<1x32xf32>
    %c0_38 = arith.constant 0 : index
    %c0_39 = arith.constant 0 : index
    %67 = vector.load %arg8[%c0_38, %c0_39] : memref<32x32xf32, #tpu.memory_space<vmem>>, vector<32x32xf32>
    %cst_40 = arith.constant dense<0.000000e+00> : vector<8x32xf32>
    %68 = tpu.matmul %54, %67, %cst_40 {dimension_numbers = #tpu.dot_dimension_numbers<[1], [0], [0], [1], [0, 0, 1, 1], [], []>} : vector<8x32xf32>, vector<32x32xf32>, vector<8x32xf32> -> vector<8x32xf32>
    %69 = vector.broadcast %61 : vector<1x32xf32> to vector<8x32xf32>
    %70 = arith.addf %68, %69 : vector<8x32xf32>
    %71 = arith.addf %4, %70 : vector<8x32xf32>
    %cst_41 = arith.constant dense<0.000000e+00> : vector<8xf32>
    %72 = vector.multi_reduction <add>, %71, %cst_41 [1] : vector<8x32xf32> to vector<8xf32>
    %73 = vector.shape_cast %72 : vector<8xf32> to vector<8x1xf32>
    %cst_42 = arith.constant 3.200000e+01 : f32
    %74 = vector.broadcast %cst_42 : f32 to vector<8x1xf32>
    %75 = arith.divf %73, %74 : vector<8x1xf32>
    %76 = vector.broadcast %75 : vector<8x1xf32> to vector<8x32xf32>
    %77 = arith.subf %71, %76 : vector<8x32xf32>
    %78 = arith.mulf %77, %77 : vector<8x32xf32>
    %cst_43 = arith.constant dense<0.000000e+00> : vector<8xf32>
    %79 = vector.multi_reduction <add>, %78, %cst_43 [1] : vector<8x32xf32> to vector<8xf32>
    %80 = vector.shape_cast %79 : vector<8xf32> to vector<8x1xf32>
    %cst_44 = arith.constant 3.200000e+01 : f32
    %81 = vector.broadcast %cst_44 : f32 to vector<8x1xf32>
    %82 = arith.divf %80, %81 : vector<8x1xf32>
    %83 = vector.broadcast %75 : vector<8x1xf32> to vector<8x32xf32>
    %84 = arith.subf %71, %83 : vector<8x32xf32>
    %cst_45 = arith.constant 9.99999974E-6 : f32
    %85 = vector.broadcast %cst_45 : f32 to vector<8x1xf32>
    %86 = arith.addf %82, %85 : vector<8x1xf32>
    %87 = math.rsqrt %86 : vector<8x1xf32>
    %88 = vector.broadcast %87 : vector<8x1xf32> to vector<8x32xf32>
    %89 = arith.mulf %84, %88 : vector<8x32xf32>
    %90 = vector.broadcast %63 : vector<1x32xf32> to vector<8x32xf32>
    %91 = arith.mulf %89, %90 : vector<8x32xf32>
    %92 = vector.broadcast %64 : vector<1x32xf32> to vector<8x32xf32>
    %93 = arith.addf %91, %92 : vector<8x32xf32>
    %c0_46 = arith.constant 0 : index
    %c0_47 = arith.constant 0 : index
    %94 = vector.load %arg9[%c0_46, %c0_47] : memref<32x128xf32, #tpu.memory_space<vmem>>, vector<32x128xf32>
    %cst_48 = arith.constant dense<0.000000e+00> : vector<8x128xf32>
    %95 = tpu.matmul %93, %94, %cst_48 {dimension_numbers = #tpu.dot_dimension_numbers<[1], [0], [0], [1], [0, 0, 1, 1], [], []>} : vector<8x32xf32>, vector<32x128xf32>, vector<8x128xf32> -> vector<8x128xf32>
    %c0_49 = arith.constant 0 : index
    %c0_50 = arith.constant 0 : index
    %96 = vector.load %arg10[%c0_49, %c0_50] : memref<1x128xf32, #tpu.memory_space<vmem>>, vector<1x128xf32>
    %97 = vector.broadcast %96 : vector<1x128xf32> to vector<8x128xf32>
    %98 = arith.addf %95, %97 : vector<8x128xf32>
    %cst_51 = arith.constant 0.000000e+00 : f32
    %99 = vector.broadcast %cst_51 : f32 to vector<8x128xf32>
    %100 = arith.maximumf %98, %99 : vector<8x128xf32>
    %c0_52 = arith.constant 0 : index
    %c0_53 = arith.constant 0 : index
    %101 = vector.load %arg11[%c0_52, %c0_53] : memref<128x32xf32, #tpu.memory_space<vmem>>, vector<128x32xf32>
    %cst_54 = arith.constant dense<0.000000e+00> : vector<8x32xf32>
    %102 = tpu.matmul %100, %101, %cst_54 {dimension_numbers = #tpu.dot_dimension_numbers<[1], [0], [0], [1], [0, 0, 1, 1], [], []>} : vector<8x128xf32>, vector<128x32xf32>, vector<8x32xf32> -> vector<8x32xf32>
    %103 = vector.broadcast %62 : vector<1x32xf32> to vector<8x32xf32>
    %104 = arith.addf %102, %103 : vector<8x32xf32>
    %105 = arith.addf %93, %104 : vector<8x32xf32>
    %cst_55 = arith.constant dense<0.000000e+00> : vector<8xf32>
    %106 = vector.multi_reduction <add>, %105, %cst_55 [1] : vector<8x32xf32> to vector<8xf32>
    %107 = vector.shape_cast %106 : vector<8xf32> to vector<8x1xf32>
    %cst_56 = arith.constant 3.200000e+01 : f32
    %108 = vector.broadcast %cst_56 : f32 to vector<8x1xf32>
    %109 = arith.divf %107, %108 : vector<8x1xf32>
    %110 = vector.broadcast %109 : vector<8x1xf32> to vector<8x32xf32>
    %111 = arith.subf %105, %110 : vector<8x32xf32>
    %112 = arith.mulf %111, %111 : vector<8x32xf32>
    %cst_57 = arith.constant dense<0.000000e+00> : vector<8xf32>
    %113 = vector.multi_reduction <add>, %112, %cst_57 [1] : vector<8x32xf32> to vector<8xf32>
    %114 = vector.shape_cast %113 : vector<8xf32> to vector<8x1xf32>
    %cst_58 = arith.constant 3.200000e+01 : f32
    %115 = vector.broadcast %cst_58 : f32 to vector<8x1xf32>
    %116 = arith.divf %114, %115 : vector<8x1xf32>
    %117 = vector.broadcast %109 : vector<8x1xf32> to vector<8x32xf32>
    %118 = arith.subf %105, %117 : vector<8x32xf32>
    %cst_59 = arith.constant 9.99999974E-6 : f32
    %119 = vector.broadcast %cst_59 : f32 to vector<8x1xf32>
    %120 = arith.addf %116, %119 : vector<8x1xf32>
    %121 = math.rsqrt %120 : vector<8x1xf32>
    %122 = vector.broadcast %121 : vector<8x1xf32> to vector<8x32xf32>
    %123 = arith.mulf %118, %122 : vector<8x32xf32>
    %124 = vector.broadcast %65 : vector<1x32xf32> to vector<8x32xf32>
    %125 = arith.mulf %123, %124 : vector<8x32xf32>
    %126 = vector.broadcast %66 : vector<1x32xf32> to vector<8x32xf32>
    %127 = arith.addf %125, %126 : vector<8x32xf32>
    %c0_60 = arith.constant 0 : index
    %c0_61 = arith.constant 0 : index
    %c0_62 = arith.constant 0 : index
    %128 = vector.load %arg13[%c0_60, %c0_61, %c0_62] : memref<1x8x32xf32, #tpu.memory_space<vmem>>, vector<1x8x32xf32>
    %129 = vector.shape_cast %128 : vector<1x8x32xf32> to vector<8x32xf32>
    %130 = vector.shape_cast %127 : vector<8x32xf32> to vector<1x8x32xf32>
    tpu.vector_store %arg13[%c0_60, %c0_61, %c0_62], %130 {strides = array<i32>} : memref<1x8x32xf32, #tpu.memory_space<vmem>>, vector<1x8x32xf32>,
    return
  }
  func.func @transform_0(%arg0: i32) -> (i32, i32, i32) {
    %c0_i32 = arith.constant 0 : i32
    %c0_i32_0 = arith.constant 0 : i32
    %c0_i32_1 = arith.constant 0 : i32
    return %arg0, %c0_i32, %c0_i32_0 : i32, i32, i32
  }
  func.func @transform_1(%arg0: i32) -> (i32, i32, i32) {
    %c0_i32 = arith.constant 0 : i32
    %c0_i32_0 = arith.constant 0 : i32
    %c0_i32_1 = arith.constant 0 : i32
    %c0_i32_2 = arith.constant 0 : i32
    return %c0_i32, %c0_i32_0, %c0_i32_1 : i32, i32, i32
  }
  func.func @transform_2(%arg0: i32) -> (i32, i32, i32) {
    %c0_i32 = arith.constant 0 : i32
    %c0_i32_0 = arith.constant 0 : i32
    %c0_i32_1 = arith.constant 0 : i32
    %c0_i32_2 = arith.constant 0 : i32
    return %c0_i32, %c0_i32_0, %c0_i32_1 : i32, i32, i32
  }
  func.func @transform_3(%arg0: i32) -> (i32, i32) {
    %c0_i32 = arith.constant 0 : i32
    %c0_i32_0 = arith.constant 0 : i32
    %c0_i32_1 = arith.constant 0 : i32
    return %c0_i32, %c0_i32_0 : i32, i32
  }
  func.func @transform_4(%arg0: i32) -> (i32, i32) {
    %c0_i32 = arith.constant 0 : i32
    %c0_i32_0 = arith.constant 0 : i32
    %c0_i32_1 = arith.constant 0 : i32
    return %c0_i32, %c0_i32_0 : i32, i32
  }
  func.func @transform_5(%arg0: i32) -> (i32, i32) {
    %c0_i32 = arith.constant 0 : i32
    %c0_i32_0 = arith.constant 0 : i32
    %c0_i32_1 = arith.constant 0 : i32
    return %c0_i32, %c0_i32_0 : i32, i32
  }
  func.func @transform_6(%arg0: i32) -> (i32, i32) {
    %c0_i32 = arith.constant 0 : i32
    %c0_i32_0 = arith.constant 0 : i32
    %c0_i32_1 = arith.constant 0 : i32
    return %c0_i32, %c0_i32_0 : i32, i32
  }
  func.func @transform_7(%arg0: i32) -> (i32, i32) {
    %c0_i32 = arith.constant 0 : i32
    %c0_i32_0 = arith.constant 0 : i32
    %c0_i32_1 = arith.constant 0 : i32
    return %c0_i32, %c0_i32_0 : i32, i32
  }
  func.func @transform_8(%arg0: i32) -> (i32, i32) {
    %c0_i32 = arith.constant 0 : i32
    %c0_i32_0 = arith.constant 0 : i32
    %c0_i32_1 = arith.constant 0 : i32
    return %c0_i32, %c0_i32_0 : i32, i32
  }
  func.func @transform_9(%arg0: i32) -> (i32, i32) {
    %c0_i32 = arith.constant 0 : i32
    %c0_i32_0 = arith.constant 0 : i32
    %c0_i32_1 = arith.constant 0 : i32
    return %c0_i32, %c0_i32_0 : i32, i32
  }
  func.func @transform_10(%arg0: i32) -> (i32, i32) {
    %c0_i32 = arith.constant 0 : i32
    %c0_i32_0 = arith.constant 0 : i32
    %c0_i32_1 = arith.constant 0 : i32
    return %c0_i32, %c0_i32_0 : i32, i32
  }
  func.func @transform_11(%arg0: i32) -> (i32, i32) {
    %c0_i32 = arith.constant 0 : i32
    %c0_i32_0 = arith.constant 0 : i32
    %c0_i32_1 = arith.constant 0 : i32
    return %c0_i32, %c0_i32_0 : i32, i32
  }
  func.func @transform_12(%arg0: i32) -> (i32, i32, i32) {
    %c0_i32 = arith.constant 0 : i32
    %c0_i32_0 = arith.constant 0 : i32
    %c0_i32_1 = arith.constant 0 : i32
    return %arg0, %c0_i32, %c0_i32_0 : i32, i32, i32
  }
  func.func @transform_13(%arg0: i32) -> (i32, i32, i32) {
    %c0_i32 = arith.constant 0 : i32
    %c0_i32_0 = arith.constant 0 : i32
    %c0_i32_1 = arith.constant 0 : i32
    %c0_i32_2 = arith.constant 0 : i32
    return %c0_i32, %c0_i32_0, %c0_i32_1 : i32, i32, i32
  }
  func.func @transform_14(%arg0: i32) -> (i32, i32, i32) {
    %c0_i32 = arith.constant 0 : i32
    %c0_i32_0 = arith.constant 0 : i32
    %c0_i32_1 = arith.constant 0 : i32
    %c0_i32_2 = arith.constant 0 : i32
    return %c0_i32, %c0_i32_0, %c0_i32_1 : i32, i32, i32
  }
}

</mosaic_0001>

<llo_original>
// kernel: tpu_custom_call.1
$region0: #{tpu_custom_call.1}
  #allocation0 [shape = 'u32[]', space=smem, size = 0x4, offset = 0x4, fixed_abs, tag = 'smem constant byte address 0x4 - core index']
  #allocation1 [shape = 'u32[144,128]{1,0:T(1,128)}', space=vmem, size = 0x12000, scoped, tag = 'internal scratch']
  %s0 = inlined_call_operand.vmem [shape: f32[8,8,32], index: 0, kind: input, shape index: {}]
  %s1 = inlined_call_operand.vmem [shape: f32[8,8,32], index: 1, kind: input, shape index: {}]
  %s2 = inlined_call_operand.vmem [shape: f32[8,8,32], index: 2, kind: input, shape index: {}]
  %s3 = inlined_call_operand.vmem [shape: f32[32,4], index: 3, kind: input, shape index: {}]
  %s4 = inlined_call_operand.hbm [shape: f32[4,32], index: 4, kind: input, shape index: {}]
  %s5 = inlined_call_operand.hbm [shape: f32[32,96], index: 5, kind: input, shape index: {}]
  %s6 = inlined_call_operand.vmem [shape: f32[1,96], index: 6, kind: input, shape index: {}]
  %s7 = inlined_call_operand.hbm [shape: f32[32,32], index: 7, kind: input, shape index: {}]
  %s8 = inlined_call_operand.hbm [shape: f32[32,128], index: 8, kind: input, shape index: {}]
  %s9 = inlined_call_operand.hbm [shape: f32[1,128], index: 9, kind: input, shape index: {}]
  %s10 = inlined_call_operand.vmem [shape: f32[128,32], index: 10, kind: input, shape index: {}]
  %s11 = inlined_call_operand.vmem [shape: f32[6,32], index: 11, kind: input, shape index: {}]
  %s12 = inlined_call_operand.hbm [shape: f32[8,8,32], index: 12, kind: output, shape index: {0}]
  %s13 = inlined_call_operand.hbm [shape: f32[16,8,32], index: 13, kind: output, shape index: {1}]
  %s14 = inlined_call_operand.hbm [shape: f32[16,8,32], index: 14, kind: output, shape index: {2}]
  %15 = xla_tuple %s12, %s13, %s14
  %s16 = sld [smem:[#allocation0]]
  $region121: #{tpu_custom_call.1} parent=0
    _
  %s18 = ssub.s32 1, %s16
  %s19 = scalar_select 0, %s18, %s16
  $region1: #{tpu_custom_call.1} parent=0
    #allocation2 [shape = 'u8[2048]{0}', space=vmem, size = 0x800, scoped, tag = 'input window, operand 4, single buffered']
    #allocation3 [shape = 's32[2]{0}', space=sflag, size = 0x8, scoped, tag = 'scoped memory for tpu_custom_call.1']
    #allocation4 [shape = 's32[2]{0}', space=sflag, size = 0x8, scoped, tag = 'scoped memory for tpu_custom_call.1']
    #allocation5 [shape = 'u8[16384]{0}', space=vmem, size = 0x4000, scoped, tag = 'input window, operand 5, single buffered']
    #allocation6 [shape = 's32[1]{0}', space=sflag, size = 0x4, scoped, tag = 'scoped memory for tpu_custom_call.1']
    #allocation7 [shape = 'u8[16384]{0}', space=vmem, size = 0x4000, scoped, tag = 'input window, operand 7, single buffered']
    #allocation8 [shape = 'u8[16384]{0}', space=vmem, size = 0x4000, scoped, tag = 'input window, operand 8, single buffered']
    #allocation9 [shape = 's32[1]{0}', space=sflag, size = 0x4, scoped, tag = 'scoped memory for tpu_custom_call.1']
    #allocation10 [shape = 'u8[512]{0}', space=vmem, size = 0x400, scoped, tag = 'input window, operand 9, single buffered']
    #allocation11 [shape = 'u8[8192]{0}', space=vmem, size = 0x2000, scoped, tag = 'output window, operand 0']
    #allocation12 [shape = 'u8[65536]{0}', space=vmem, size = 0x10000, scoped, tag = 'output window, operand 1, single buffered']
    #allocation13 [shape = 's32[1]{0}', space=sflag, size = 0x4, scoped, tag = 'scoped memory for tpu_custom_call.1']
    #allocation14 [shape = 'u8[65536]{0}', space=vmem, size = 0x10000, scoped, tag = 'output window, operand 2, single buffered']
    %20 = vsyncpa [#allocation3], 0
    %21 = vsyncpa [#allocation6], 0
    %22 = vsyncpa [#allocation9], 0
    %23 = vsyncpa [#allocation4], 0
    %s24 = scalar_lea.sflag [#allocation4], 1
    %25 = vsyncpa %s24, 0
    %26 = vsyncpa [#allocation13], 0
    loop: start=0, step=1, limit=10
    $region2: #{tpu_custom_call.1} parent=1 // loop_pre_header
      _
    $region3: #{tpu_custom_call.1} parent=1 // loop_header
      %s28 = sphi 0, %s32
      %p29 = scmp.ge.s32.totalorder %s28, 10
      %s38 = sphi 0, %s40
      %s41 = sphi 0, %s38
      %s42 = sphi 0, %s41
      %s58 = sphi 0, %s42
      %s62 = sphi 0, %s62
      %s64 = sphi 0, %s62
      %s65 = sphi 0, %s64
      %s79 = sphi 0, %s65
      %s83 = sphi 0, %s83
      %s85 = sphi 0, %s83
      %s86 = sphi 0, %s85
      %s100 = sphi 0, %s86
      %s104 = sphi 0, %s104
      %s106 = sphi 0, %s104
      %s107 = sphi 0, %s106
      %s121 = sphi 0, %s107
      %s125 = sphi 0, %s125
      %s127 = sphi 0, %s125
      %s128 = sphi 0, %s127
      %s142 = sphi 0, %s128
      %s146 = sphi 0, %s146
      %s148 = sphi 0, %s146
      %s149 = sphi 0, %s148
      %s163 = sphi 0, %s149
      %s167 = sphi 0, %s167
      %s169 = sphi 0, %s167
      %s170 = sphi 0, %s169
      %s184 = sphi 0, %s170
      %s188 = sphi 0, %s188
      %s190 = sphi 0, %s188
      %s191 = sphi 0, %s190
      %s205 = sphi 0, %s191
      %s209 = sphi 0, %s209
      %s211 = sphi 0, %s209
      %s212 = sphi 0, %s211
      %s226 = sphi 0, %s212
      %s230 = sphi 0, %s230
      %s232 = sphi 0, %s230
      %s233 = sphi 0, %s232
      %s247 = sphi 0, %s233
      %s251 = sphi 0, %s251
      %s253 = sphi 0, %s251
      %s254 = sphi 0, %s253
      %s268 = sphi 0, %s254
      %s272 = sphi 0, %s272
      %s274 = sphi 0, %s272
      %s275 = sphi 0, %s274
      %s289 = sphi 0, %s275
      %s295 = sphi 0, %s297
      %s298 = sphi 0, %s295
      %s299 = sphi 0, %s298
      %s315 = sphi 0, %s299
      %s319 = sphi 0, %s319
      %s321 = sphi 0, %s319
      %s322 = sphi 0, %s321
      %s336 = sphi 0, %s322
      %s340 = sphi 0, %s340
      %s342 = sphi 0, %s340
      %s343 = sphi 0, %s342
      %s357 = sphi 0, %s343
    $region4: #{tpu_custom_call.1} parent=1 // loop_header_branch
      %31 = sbr.rel (%p29) target = $region8
    $region5: #{tpu_custom_call.1} parent=1 // loop_body
      %s33 = ssub.s32 %s28, 1
      %s34 = ssub.s32 %s28, 2
      %s35 = sadd.s32 %s28, 1
      %s36 = ssub.s32 %s28, %s35
      %p37 = scmp.eq.s32.totalorder %s36, 0
      %s39 = sadd.s32 %s38, 1
      %s40 = scalar_select %p37, %s38, %s39
      %p43 = pneg %p37
      %p44 = scmp.eq.s32.totalorder %s28, 7
      %p45 = por %p43, %p44
      %p46 = scmp.ne.s32.totalorder %s38, %s41
      %p47 = scmp.eq.s32.totalorder %s28, 0
      %p48 = por %p46, %p47
      %p49 = scmp.ne.s32.totalorder %s38, %s41
      %p50 = scmp.eq.s32.totalorder %s33, 7
      %p51 = por %p49, %p50
      %p52 = scmp.ne.s32.totalorder %s41, %s42
      %p53 = scmp.eq.s32.totalorder %s33, 0
      %p54 = por %p52, %p53
      %p55 = scmp.ne.s32.totalorder %s41, %s42
      %p56 = scmp.eq.s32.totalorder %s34, 7
      %p57 = por %p55, %p56
      %p59 = scmp.ne.s32.totalorder %s42, %s58
      %p60 = scmp.eq.s32.totalorder %s34, 0
      %p61 = por %p59, %p60
      %s63 = sadd.s32 %s62, 1
      %p66 = scmp.eq.s32.totalorder %s28, 7
      %p67 = scmp.ne.s32.totalorder %s62, %s64
      %p68 = scmp.eq.s32.totalorder %s28, 0
      %p69 = por %p67, %p68
      %p70 = scmp.ne.s32.totalorder %s62, %s64
      %p71 = scmp.eq.s32.totalorder %s33, 7
      %p72 = por %p70, %p71
      %p73 = scmp.ne.s32.totalorder %s64, %s65
      %p74 = scmp.eq.s32.totalorder %s33, 0
      %p75 = por %p73, %p74
      %p76 = scmp.ne.s32.totalorder %s64, %s65
      %p77 = scmp.eq.s32.totalorder %s34, 7
      %p78 = por %p76, %p77
      %p80 = scmp.ne.s32.totalorder %s65, %s79
      %p81 = scmp.eq.s32.totalorder %s34, 0
      %p82 = por %p80, %p81
      %s84 = sadd.s32 %s83, 1
      %p87 = scmp.eq.s32.totalorder %s28, 7
      %p88 = scmp.ne.s32.totalorder %s83, %s85
      %p89 = scmp.eq.s32.totalorder %s28, 0
      %p90 = por %p88, %p89
      %p91 = scmp.ne.s32.totalorder %s83, %s85
      %p92 = scmp.eq.s32.totalorder %s33, 7
      %p93 = por %p91, %p92
      %p94 = scmp.ne.s32.totalorder %s85, %s86
      %p95 = scmp.eq.s32.totalorder %s33, 0
      %p96 = por %p94, %p95
      %p97 = scmp.ne.s32.totalorder %s85, %s86
      %p98 = scmp.eq.s32.totalorder %s34, 7
      %p99 = por %p97, %p98
      %p101 = scmp.ne.s32.totalorder %s86, %s100
      %p102 = scmp.eq.s32.totalorder %s34, 0
      %p103 = por %p101, %p102
      %s105 = sadd.s32 %s104, 1
      %p108 = scmp.eq.s32.totalorder %s28, 7
      %p109 = scmp.ne.s32.totalorder %s104, %s106
      %p110 = scmp.eq.s32.totalorder %s28, 0
      %p111 = por %p109, %p110
      %p112 = scmp.ne.s32.totalorder %s104, %s106
      %p113 = scmp.eq.s32.totalorder %s33, 7
      %p114 = por %p112, %p113
      %p115 = scmp.ne.s32.totalorder %s106, %s107
      %p116 = scmp.eq.s32.totalorder %s33, 0
      %p117 = por %p115, %p116
      %p118 = scmp.ne.s32.totalorder %s106, %s107
      %p119 = scmp.eq.s32.totalorder %s34, 7
      %p120 = por %p118, %p119
      %p122 = scmp.ne.s32.totalorder %s107, %s121
      %p123 = scmp.eq.s32.totalorder %s34, 0
      %p124 = por %p122, %p123
      %s126 = sadd.s32 %s125, 1
      %p129 = scmp.eq.s32.totalorder %s28, 7
      %p130 = scmp.ne.s32.totalorder %s125, %s127
      %p131 = scmp.eq.s32.totalorder %s28, 0
      %p132 = por %p130, %p131
      %p133 = scmp.ne.s32.totalorder %s125, %s127
      %p134 = scmp.eq.s32.totalorder %s33, 7
      %p135 = por %p133, %p134
      %p136 = scmp.ne.s32.totalorder %s127, %s128
      %p137 = scmp.eq.s32.totalorder %s33, 0
      %p138 = por %p136, %p137
      %p139 = scmp.ne.s32.totalorder %s127, %s128
      %p140 = scmp.eq.s32.totalorder %s34, 7
      %p141 = por %p139, %p140
      %p143 = scmp.ne.s32.totalorder %s128, %s142
      %p144 = scmp.eq.s32.totalorder %s34, 0
      %p145 = por %p143, %p144
      %s147 = sadd.s32 %s146, 1
      %p150 = scmp.eq.s32.totalorder %s28, 7
      %p151 = scmp.ne.s32.totalorder %s146, %s148
      %p152 = scmp.eq.s32.totalorder %s28, 0
      %p153 = por %p151, %p152
      %p154 = scmp.ne.s32.totalorder %s146, %s148
      %p155 = scmp.eq.s32.totalorder %s33, 7
      %p156 = por %p154, %p155
      %p157 = scmp.ne.s32.totalorder %s148, %s149
      %p158 = scmp.eq.s32.totalorder %s33, 0
      %p159 = por %p157, %p158
      %p160 = scmp.ne.s32.totalorder %s148, %s149
      %p161 = scmp.eq.s32.totalorder %s34, 7
      %p162 = por %p160, %p161
      %p164 = scmp.ne.s32.totalorder %s149, %s163
      %p165 = scmp.eq.s32.totalorder %s34, 0
      %p166 = por %p164, %p165
      %s168 = sadd.s32 %s167, 1
      %p171 = scmp.eq.s32.totalorder %s28, 7
      %p172 = scmp.ne.s32.totalorder %s167, %s169
      %p173 = scmp.eq.s32.totalorder %s28, 0
      %p174 = por %p172, %p173
      %p175 = scmp.ne.s32.totalorder %s167, %s169
      %p176 = scmp.eq.s32.totalorder %s33, 7
      %p177 = por %p175, %p176
      %p178 = scmp.ne.s32.totalorder %s169, %s170
      %p179 = scmp.eq.s32.totalorder %s33, 0
      %p180 = por %p178, %p179
      %p181 = scmp.ne.s32.totalorder %s169, %s170
      %p182 = scmp.eq.s32.totalorder %s34, 7
      %p183 = por %p181, %p182
      %p185 = scmp.ne.s32.totalorder %s170, %s184
      %p186 = scmp.eq.s32.totalorder %s34, 0
      %p187 = por %p185, %p186
      %s189 = sadd.s32 %s188, 1
      %p192 = scmp.eq.s32.totalorder %s28, 7
      %p193 = scmp.ne.s32.totalorder %s188, %s190
      %p194 = scmp.eq.s32.totalorder %s28, 0
      %p195 = por %p193, %p194
      %p196 = scmp.ne.s32.totalorder %s188, %s190
      %p197 = scmp.eq.s32.totalorder %s33, 7
      %p198 = por %p196, %p197
      %p199 = scmp.ne.s32.totalorder %s190, %s191
      %p200 = scmp.eq.s32.totalorder %s33, 0
      %p201 = por %p199, %p200
      %p202 = scmp.ne.s32.totalorder %s190, %s191
      %p203 = scmp.eq.s32.totalorder %s34, 7
      %p204 = por %p202, %p203
      %p206 = scmp.ne.s32.totalorder %s191, %s205
      %p207 = scmp.eq.s32.totalorder %s34, 0
      %p208 = por %p206, %p207
      %s210 = sadd.s32 %s209, 1
      %p213 = scmp.eq.s32.totalorder %s28, 7
      %p214 = scmp.ne.s32.totalorder %s209, %s211
      %p215 = scmp.eq.s32.totalorder %s28, 0
      %p216 = por %p214, %p215
      %p217 = scmp.ne.s32.totalorder %s209, %s211
      %p218 = scmp.eq.s32.totalorder %s33, 7
      %p219 = por %p217, %p218
      %p220 = scmp.ne.s32.totalorder %s211, %s212
      %p221 = scmp.eq.s32.totalorder %s33, 0
      %p222 = por %p220, %p221
      %p223 = scmp.ne.s32.totalorder %s211, %s212
      %p224 = scmp.eq.s32.totalorder %s34, 7
      %p225 = por %p223, %p224
      %p227 = scmp.ne.s32.totalorder %s212, %s226
      %p228 = scmp.eq.s32.totalorder %s34, 0
      %p229 = por %p227, %p228
      %s231 = sadd.s32 %s230, 1
      %p234 = scmp.eq.s32.totalorder %s28, 7
      %p235 = scmp.ne.s32.totalorder %s230, %s232
      %p236 = scmp.eq.s32.totalorder %s28, 0
      %p237 = por %p235, %p236
      %p238 = scmp.ne.s32.totalorder %s230, %s232
      %p239 = scmp.eq.s32.totalorder %s33, 7
      %p240 = por %p238, %p239
      %p241 = scmp.ne.s32.totalorder %s232, %s233
      %p242 = scmp.eq.s32.totalorder %s33, 0
      %p243 = por %p241, %p242
      %p244 = scmp.ne.s32.totalorder %s232, %s233
      %p245 = scmp.eq.s32.totalorder %s34, 7
      %p246 = por %p244, %p245
      %p248 = scmp.ne.s32.totalorder %s233, %s247
      %p249 = scmp.eq.s32.totalorder %s34, 0
      %p250 = por %p248, %p249
      %s252 = sadd.s32 %s251, 1
      %p255 = scmp.eq.s32.totalorder %s28, 7
      %p256 = scmp.ne.s32.totalorder %s251, %s253
      %p257 = scmp.eq.s32.totalorder %s28, 0
      %p258 = por %p256, %p257
      %p259 = scmp.ne.s32.totalorder %s251, %s253
      %p260 = scmp.eq.s32.totalorder %s33, 7
      %p261 = por %p259, %p260
      %p262 = scmp.ne.s32.totalorder %s253, %s254
      %p263 = scmp.eq.s32.totalorder %s33, 0
      %p264 = por %p262, %p263
      %p265 = scmp.ne.s32.totalorder %s253, %s254
      %p266 = scmp.eq.s32.totalorder %s34, 7
      %p267 = por %p265, %p266
      %p269 = scmp.ne.s32.totalorder %s254, %s268
      %p270 = scmp.eq.s32.totalorder %s34, 0
      %p271 = por %p269, %p270
      %s273 = sadd.s32 %s272, 1
      %p276 = scmp.eq.s32.totalorder %s28, 7
      %p277 = scmp.ne.s32.totalorder %s272, %s274
      %p278 = scmp.eq.s32.totalorder %s28, 0
      %p279 = por %p277, %p278
      %p280 = scmp.ne.s32.totalorder %s272, %s274
      %p281 = scmp.eq.s32.totalorder %s33, 7
      %p282 = por %p280, %p281
      %p283 = scmp.ne.s32.totalorder %s274, %s275
      %p284 = scmp.eq.s32.totalorder %s33, 0
      %p285 = por %p283, %p284
      %p286 = scmp.ne.s32.totalorder %s274, %s275
      %p287 = scmp.eq.s32.totalorder %s34, 7
      %p288 = por %p286, %p287
      %p290 = scmp.ne.s32.totalorder %s275, %s289
      %p291 = scmp.eq.s32.totalorder %s34, 0
      %p292 = por %p290, %p291
      %s293 = ssub.s32 %s28, %s35
      %p294 = scmp.eq.s32.totalorder %s293, 0
      %s296 = sadd.s32 %s295, 1
      %s297 = scalar_select %p294, %s295, %s296
      %p300 = pneg %p294
      %p301 = scmp.eq.s32.totalorder %s28, 7
      %p302 = por %p300, %p301
      %p303 = scmp.ne.s32.totalorder %s295, %s298
      %p304 = scmp.eq.s32.totalorder %s28, 0
      %p305 = por %p303, %p304
      %p306 = scmp.ne.s32.totalorder %s295, %s298
      %p307 = scmp.eq.s32.totalorder %s33, 7
      %p308 = por %p306, %p307
      %p309 = scmp.ne.s32.totalorder %s298, %s299
      %p310 = scmp.eq.s32.totalorder %s33, 0
      %p311 = por %p309, %p310
      %p312 = scmp.ne.s32.totalorder %s298, %s299
      %p313 = scmp.eq.s32.totalorder %s34, 7
      %p314 = por %p312, %p313
      %p316 = scmp.ne.s32.totalorder %s299, %s315
      %p317 = scmp.eq.s32.totalorder %s34, 0
      %p318 = por %p316, %p317
      %s320 = sadd.s32 %s319, 1
      %p323 = scmp.eq.s32.totalorder %s28, 7
      %p324 = scmp.ne.s32.totalorder %s319, %s321
      %p325 = scmp.eq.s32.totalorder %s28, 0
      %p326 = por %p324, %p325
      %p327 = scmp.ne.s32.totalorder %s319, %s321
      %p328 = scmp.eq.s32.totalorder %s33, 7
      %p329 = por %p327, %p328
      %p330 = scmp.ne.s32.totalorder %s321, %s322
      %p331 = scmp.eq.s32.totalorder %s33, 0
      %p332 = por %p330, %p331
      %p333 = scmp.ne.s32.totalorder %s321, %s322
      %p334 = scmp.eq.s32.totalorder %s34, 7
      %p335 = por %p333, %p334
      %p337 = scmp.ne.s32.totalorder %s322, %s336
      %p338 = scmp.eq.s32.totalorder %s34, 0
      %p339 = por %p337, %p338
      %s341 = sadd.s32 %s340, 1
      %p344 = scmp.eq.s32.totalorder %s28, 7
      %p345 = scmp.ne.s32.totalorder %s340, %s342
      %p346 = scmp.eq.s32.totalorder %s28, 0
      %p347 = por %p345, %p346
      %p348 = scmp.ne.s32.totalorder %s340, %s342
      %p349 = scmp.eq.s32.totalorder %s33, 7
      %p350 = por %p348, %p349
      %p351 = scmp.ne.s32.totalorder %s342, %s343
      %p352 = scmp.eq.s32.totalorder %s33, 0
      %p353 = por %p351, %p352
      %p354 = scmp.ne.s32.totalorder %s342, %s343
      %p355 = scmp.eq.s32.totalorder %s34, 7
      %p356 = por %p354, %p355
      %p358 = scmp.ne.s32.totalorder %s343, %s357
      %p359 = scmp.eq.s32.totalorder %s34, 0
      %p360 = por %p358, %p359
      %p361 = scmp.le.s32.totalorder 1, %s28
      %p362 = scmp.lt.s32.totalorder %s28, 9
      %p363 = pnand %p361, %p362
      %p364 = pneg %p363
      // Predicated region
      $region9: #{tpu_custom_call.1} parent=5 // pred_check
        _
      $region10: #{tpu_custom_call.1} parent=5 // pred_check_branch
        %366 = sbr.rel (%p363) target = $region12
      $region11: #{tpu_custom_call.1} parent=5 // pred_region
        %s367 = ssub.s32 %s28, 1
        // Predicated region
        $region13: #{tpu_custom_call.1} parent=11 // pred_check
          %p368 = pneg %p75
        $region14: #{tpu_custom_call.1} parent=11 // pred_check_branch
          %370 = sbr.rel (%p368) target = $region16
        $region15: #{tpu_custom_call.1} parent=11 // pred_region
          _
        $region16: #{tpu_custom_call.1} parent=11 // pred_fallthru
          _
        // Predicated region
        $region17: #{tpu_custom_call.1} parent=11 // pred_check
          %p371 = pneg %p96
        $region18: #{tpu_custom_call.1} parent=11 // pred_check_branch
          %373 = sbr.rel (%p371) target = $region20
        $region19: #{tpu_custom_call.1} parent=11 // pred_region
          _
        $region20: #{tpu_custom_call.1} parent=11 // pred_fallthru
          _
        // Predicated region
        $region21: #{tpu_custom_call.1} parent=11 // pred_check
          %p374 = pneg %p117
        $region22: #{tpu_custom_call.1} parent=11 // pred_check_branch
          %376 = sbr.rel (%p374) target = $region24
        $region23: #{tpu_custom_call.1} parent=11 // pred_region
          _
        $region24: #{tpu_custom_call.1} parent=11 // pred_fallthru
          _
        // Predicated region
        $region25: #{tpu_custom_call.1} parent=11 // pred_check
          %p377 = pneg %p138
        $region26: #{tpu_custom_call.1} parent=11 // pred_check_branch
          %379 = sbr.rel (%p377) target = $region28
        $region27: #{tpu_custom_call.1} parent=11 // pred_region
          %s381 = ssub.s32 64, 64
          %382 = vsyncadd [#allocation3], %s381
          %s384 = sshll.u32 [#allocation2], 4
          %s385 = int_to_ptr.vmem [resolvable:$true] %s384
          %387 = dma.hbm_to_vmem [thread:$0]  %s4, 64, %s385, [#allocation3]
        $region28: #{tpu_custom_call.1} parent=11 // pred_fallthru
          _
        // Predicated region
        $region29: #{tpu_custom_call.1} parent=11 // pred_check
          %p388 = pneg %p159
        $region30: #{tpu_custom_call.1} parent=11 // pred_check_branch
          %390 = sbr.rel (%p388) target = $region32
        $region31: #{tpu_custom_call.1} parent=11 // pred_region
          %s392 = ssub.s32 512, 512
          %393 = vsyncadd [#allocation6], %s392
          %s394 = sshll.u32 [#allocation5], 4
          %s395 = int_to_ptr.vmem [resolvable:$true] %s394
          %400 = dma.hbm_to_vmem [thread:$0]  %s5, 512, %s395, [#allocation6], 128, 128, 8
        $region32: #{tpu_custom_call.1} parent=11 // pred_fallthru
          _
        // Predicated region
        $region33: #{tpu_custom_call.1} parent=11 // pred_check
          %p401 = pneg %p180
        $region34: #{tpu_custom_call.1} parent=11 // pred_check_branch
          %403 = sbr.rel (%p401) target = $region36
        $region35: #{tpu_custom_call.1} parent=11 // pred_region
          _
        $region36: #{tpu_custom_call.1} parent=11 // pred_fallthru
          _
        // Predicated region
        $region37: #{tpu_custom_call.1} parent=11 // pred_check
          %p404 = pneg %p201
        $region38: #{tpu_custom_call.1} parent=11 // pred_check_branch
          %406 = sbr.rel (%p404) target = $region40
        $region39: #{tpu_custom_call.1} parent=11 // pred_region
          %s408 = ssub.s32 512, 512
          %409 = vsyncadd [#allocation6], %s408
          %s410 = sshll.u32 [#allocation7], 4
          %s411 = int_to_ptr.vmem [resolvable:$true] %s410
          %416 = dma.hbm_to_vmem [thread:$0]  %s7, 512, %s411, [#allocation6], 128, 128, 8
        $region40: #{tpu_custom_call.1} parent=11 // pred_fallthru
          _
        // Predicated region
        $region41: #{tpu_custom_call.1} parent=11 // pred_check
          %p417 = pneg %p222
        $region42: #{tpu_custom_call.1} parent=11 // pred_check_branch
          %419 = sbr.rel (%p417) target = $region44
        $region43: #{tpu_custom_call.1} parent=11 // pred_region
          %s421 = ssub.s32 512, 512
          %422 = vsyncadd [#allocation9], %s421
          %s423 = sshll.u32 [#allocation8], 4
          %s424 = int_to_ptr.vmem [resolvable:$true] %s423
          %429 = dma.hbm_to_vmem [thread:$0]  %s8, 512, %s424, [#allocation9], 128, 128, 8
        $region44: #{tpu_custom_call.1} parent=11 // pred_fallthru
          _
        // Predicated region
        $region45: #{tpu_custom_call.1} parent=11 // pred_check
          %p430 = pneg %p243
        $region46: #{tpu_custom_call.1} parent=11 // pred_check_branch
          %432 = sbr.rel (%p430) target = $region48
        $region47: #{tpu_custom_call.1} parent=11 // pred_region
          %s434 = ssub.s32 16, 16
          %435 = vsyncadd [#allocation9], %s434
          %s437 = sshll.u32 [#allocation10], 4
          %s438 = int_to_ptr.vmem [resolvable:$true] %s437
          %440 = dma.hbm_to_vmem [thread:$0]  %s9, 16, %s438, [#allocation9]
        $region48: #{tpu_custom_call.1} parent=11 // pred_fallthru
          _
        // Predicated region
        $region49: #{tpu_custom_call.1} parent=11 // pred_check
          %p441 = pneg %p264
        $region50: #{tpu_custom_call.1} parent=11 // pred_check_branch
          %443 = sbr.rel (%p441) target = $region52
        $region51: #{tpu_custom_call.1} parent=11 // pred_region
          _
        $region52: #{tpu_custom_call.1} parent=11 // pred_fallthru
          _
        // Predicated region
        $region53: #{tpu_custom_call.1} parent=11 // pred_check
          %p444 = pneg %p285
        $region54: #{tpu_custom_call.1} parent=11 // pred_check_branch
          %446 = sbr.rel (%p444) target = $region56
        $region55: #{tpu_custom_call.1} parent=11 // pred_region
          _
        $region56: #{tpu_custom_call.1} parent=11 // pred_fallthru
          _
      $region12: #{tpu_custom_call.1} parent=5 // pred_fallthru
        _
      %p447 = scmp.lt.s32.totalorder %s28, 8
      // Predicated region
      $region57: #{tpu_custom_call.1} parent=5 // pred_check
        %p448 = pneg %p447
      $region58: #{tpu_custom_call.1} parent=5 // pred_check_branch
        %450 = sbr.rel (%p448) target = $region60
      $region59: #{tpu_custom_call.1} parent=5 // pred_region
        // Predicated region
        $region61: #{tpu_custom_call.1} parent=59 // pred_check
          %p451 = pneg %p48
        $region62: #{tpu_custom_call.1} parent=59 // pred_check_branch
          %453 = sbr.rel (%p451) target = $region64
        $region63: #{tpu_custom_call.1} parent=59 // pred_region
          %p454 = scmp.lt.s32.totalorder %s28, 7
          %s455 = scalar_select %p454, %s28, 7
          %s456 = smul.addr %s455, 8
          %s457 = scalar_lea.vmem %s0, %s456
        $region64: #{tpu_custom_call.1} parent=59 // pred_fallthru
          _
      $region60: #{tpu_custom_call.1} parent=5 // pred_fallthru
        _
      %p458 = scmp.le.s32.totalorder 1, %s28
      %p459 = scmp.lt.s32.totalorder %s28, 9
      %p460 = pnand %p458, %p459
      %p461 = pneg %p460
      // Predicated region
      $region65: #{tpu_custom_call.1} parent=5 // pred_check
        _
      $region66: #{tpu_custom_call.1} parent=5 // pred_check_branch
        %463 = sbr.rel (%p460) target = $region68
      $region67: #{tpu_custom_call.1} parent=5 // pred_region
        %s464 = ssub.s32 %s28, 1
        // Predicated region
        $region69: #{tpu_custom_call.1} parent=67 // pred_check
          %p465 = pneg %p138
        $region70: #{tpu_custom_call.1} parent=67 // pred_check_branch
          %467 = sbr.rel (%p465) target = $region72
        $region71: #{tpu_custom_call.1} parent=67 // pred_region
          %468 = dma.done [#allocation3], 64
        $region72: #{tpu_custom_call.1} parent=67 // pred_fallthru
          _
        // Predicated region
        $region73: #{tpu_custom_call.1} parent=67 // pred_check
          %p469 = pneg %p159
        $region74: #{tpu_custom_call.1} parent=67 // pred_check_branch
          %471 = sbr.rel (%p469) target = $region76
        $region75: #{tpu_custom_call.1} parent=67 // pred_region
          %472 = dma.done [#allocation6], 512
        $region76: #{tpu_custom_call.1} parent=67 // pred_fallthru
          _
        // Predicated region
        $region77: #{tpu_custom_call.1} parent=67 // pred_check
          %p473 = pneg %p201
        $region78: #{tpu_custom_call.1} parent=67 // pred_check_branch
          %475 = sbr.rel (%p473) target = $region80
        $region79: #{tpu_custom_call.1} parent=67 // pred_region
          %476 = dma.done [#allocation6], 512
        $region80: #{tpu_custom_call.1} parent=67 // pred_fallthru
          _
        // Predicated region
        $region81: #{tpu_custom_call.1} parent=67 // pred_check
          %p477 = pneg %p222
        $region82: #{tpu_custom_call.1} parent=67 // pred_check_branch
          %479 = sbr.rel (%p477) target = $region84
        $region83: #{tpu_custom_call.1} parent=67 // pred_region
          %480 = dma.done [#allocation9], 512
        $region84: #{tpu_custom_call.1} parent=67 // pred_fallthru
          _
        // Predicated region
        $region85: #{tpu_custom_call.1} parent=67 // pred_check
          %p481 = pneg %p243
        $region86: #{tpu_custom_call.1} parent=67 // pred_check_branch
          %483 = sbr.rel (%p481) target = $region88
        $region87: #{tpu_custom_call.1} parent=67 // pred_region
          %484 = dma.done [#allocation9], 16
        $region88: #{tpu_custom_call.1} parent=67 // pred_fallthru
          _
        %p485 = scmp.lt.s32.totalorder %s33, 7
        %s486 = scalar_select %p485, %s33, 7
        %s487 = smul.addr %s486, 8
        %s488 = scalar_lea.vmem %s0, %s487
        %p489 = pneg %p54
        %p490 = pneg %p51
        %p491 = pneg %p75
        %p492 = pneg %p72
        %p493 = pneg %p96
        %p494 = pneg %p93
        %p495 = pneg %p117
        %p496 = pneg %p114
        %p497 = pneg %p138
        %p498 = pneg %p135
        %p499 = pneg %p159
        %p500 = pneg %p156
        %p501 = pneg %p180
        %p502 = pneg %p177
        %p503 = pneg %p201
        %p504 = pneg %p198
        %p505 = pneg %p222
        %p506 = pneg %p219
        %p507 = pneg %p243
        %p508 = pneg %p240
        %p509 = pneg %p264
        %p510 = pneg %p261
        %p511 = pneg %p285
        %p512 = pneg %p282
        %p513 = pneg %p311
        %p514 = pneg %p308
        %s515 = sand.u32 %s298, 1
        %s516 = scalar_lea.sflag [#allocation4], %s515
        %s517 = sand.u32 %s298, 1
        %s518 = smul.addr %s517, 8
        %s519 = scalar_lea.vmem [#allocation11], %s518
        %p520 = pneg %p332
        %p521 = pneg %p329
        %p522 = pneg %p353
        %p523 = pneg %p350
        %p524 = scmp.lt.s32.totalorder %s33, 7
        %s525 = scalar_select %p524, %s33, 7
        %s526 = smul.addr %s525, 8
        %s527 = scalar_lea.vmem %s0, %s526
        %p528 = scmp.eq.s32.totalorder %s33, 0
        // Predicated region
        $region89: #{tpu_custom_call.1} parent=67 // pred_check
          %p529 = pneg %p528
        $region90: #{tpu_custom_call.1} parent=67 // pred_check_branch
          %531 = sbr.rel (%p529) target = $region92
        $region91: #{tpu_custom_call.1} parent=67 // pred_region
          %v532 = vld [vmem:[%s1] sm:$0xff]
          %v533 = vld [vmem:[%s1 + $0x8] sm:$0xff]
          %v534 = vld [vmem:[%s1 + $0x10] sm:$0xff]
          %v535 = vld [vmem:[%s1 + $0x18] sm:$0xff]
          %v536 = vld [vmem:[%s1 + $0x20] sm:$0xff]
          %v537 = vld [vmem:[%s1 + $0x28] sm:$0xff]
          %v538 = vld [vmem:[%s1 + $0x30] sm:$0xff]
          %v539 = vld [vmem:[%s1 + $0x38] sm:$0xff]
          %vm540 = vcmask 261120
          %541 = vst.msk [vmem:[#allocation12] sm:$0xff] %vm540, %v532
          %542 = vst.msk [vmem:[#allocation12 + $0x8] sm:$0xff] %vm540, %v533
          %543 = vst.msk [vmem:[#allocation12 + $0x10] sm:$0xff] %vm540, %v534
          %544 = vst.msk [vmem:[#allocation12 + $0x18] sm:$0xff] %vm540, %v535
          %545 = vst.msk [vmem:[#allocation12 + $0x20] sm:$0xff] %vm540, %v536
          %546 = vst.msk [vmem:[#allocation12 + $0x28] sm:$0xff] %vm540, %v537
          %547 = vst.msk [vmem:[#allocation12 + $0x30] sm:$0xff] %vm540, %v538
          %548 = vst.msk [vmem:[#allocation12 + $0x38] sm:$0xff] %vm540, %v539
          %v549 = vld [vmem:[%s2] sm:$0xff]
          %v550 = vld [vmem:[%s2 + $0x8] sm:$0xff]
          %v551 = vld [vmem:[%s2 + $0x10] sm:$0xff]
          %v552 = vld [vmem:[%s2 + $0x18] sm:$0xff]
          %v553 = vld [vmem:[%s2 + $0x20] sm:$0xff]
          %v554 = vld [vmem:[%s2 + $0x28] sm:$0xff]
          %v555 = vld [vmem:[%s2 + $0x30] sm:$0xff]
          %v556 = vld [vmem:[%s2 + $0x38] sm:$0xff]
          %557 = vst.msk [vmem:[#allocation14] sm:$0xff] %vm540, %v549
          %558 = vst.msk [vmem:[#allocation14 + $0x8] sm:$0xff] %vm540, %v550
          %559 = vst.msk [vmem:[#allocation14 + $0x10] sm:$0xff] %vm540, %v551
          %560 = vst.msk [vmem:[#allocation14 + $0x18] sm:$0xff] %vm540, %v552
          %561 = vst.msk [vmem:[#allocation14 + $0x20] sm:$0xff] %vm540, %v553
          %562 = vst.msk [vmem:[#allocation14 + $0x28] sm:$0xff] %vm540, %v554
          %563 = vst.msk [vmem:[#allocation14 + $0x30] sm:$0xff] %vm540, %v555
          %564 = vst.msk [vmem:[#allocation14 + $0x38] sm:$0xff] %vm540, %v556
          %s565 = scalar_lea.vmem [#allocation12], 64
          %566 = vst.msk [vmem:[%s565] sm:$0xff] %vm540, 0.0
          %567 = vst.msk [vmem:[%s565 + $0x8] sm:$0xff] %vm540, 0.0
          %568 = vst.msk [vmem:[%s565 + $0x10] sm:$0xff] %vm540, 0.0
          %569 = vst.msk [vmem:[%s565 + $0x18] sm:$0xff] %vm540, 0.0
          %570 = vst.msk [vmem:[%s565 + $0x20] sm:$0xff] %vm540, 0.0
          %571 = vst.msk [vmem:[%s565 + $0x28] sm:$0xff] %vm540, 0.0
          %572 = vst.msk [vmem:[%s565 + $0x30] sm:$0xff] %vm540, 0.0
          %573 = vst.msk [vmem:[%s565 + $0x38] sm:$0xff] %vm540, 0.0
          %s574 = scalar_lea.vmem [#allocation14], 64
          %575 = vst.msk [vmem:[%s574] sm:$0xff] %vm540, 0.0
          %576 = vst.msk [vmem:[%s574 + $0x8] sm:$0xff] %vm540, 0.0
          %577 = vst.msk [vmem:[%s574 + $0x10] sm:$0xff] %vm540, 0.0
          %578 = vst.msk [vmem:[%s574 + $0x18] sm:$0xff] %vm540, 0.0
          %579 = vst.msk [vmem:[%s574 + $0x20] sm:$0xff] %vm540, 0.0
          %580 = vst.msk [vmem:[%s574 + $0x28] sm:$0xff] %vm540, 0.0
          %581 = vst.msk [vmem:[%s574 + $0x30] sm:$0xff] %vm540, 0.0
          %582 = vst.msk [vmem:[%s574 + $0x38] sm:$0xff] %vm540, 0.0
        $region92: #{tpu_custom_call.1} parent=67 // pred_fallthru
          _
        %v583 = vld [vmem:[%s527] sm:$0xff]
        %v584 = vld [vmem:[%s3] sm:$0xff]
        %v585 = vld [vmem:[%s3 + $0x8] sm:$0xff]
        %v586 = vld [vmem:[%s3 + $0x10] sm:$0xff]
        %v587 = vld [vmem:[%s3 + $0x18] sm:$0xff]
        %v588 = vld [vmem:[#allocation2] sm:$0xf]
        %v589 = vld [vmem:[#allocation5] sm:$0xff]
        %v590 = vld [vmem:[#allocation5 + $0x8] sm:$0xff]
        %v591 = vld [vmem:[#allocation5 + $0x10] sm:$0xff]
        %v592 = vld [vmem:[#allocation5 + $0x18] sm:$0xff]
        %v593 = vld [vmem:[%s6] sm:$0x1]
        %v595 = vlaneseq
        %v596 = vshrl.u32 %v595, 7
        %v597 = vsub.s32 0, %v596
        %v598 = vrot.slane %v593, %v597
        %vm600 = vcmask 261120
        %v602 = vsel %vm600, %v583, 0
        %604 = vmatprep.subr.mxu0 0.0
        %605 = vmatpush1.msra.mxu0 %v589
        %606 = vmatprep.subr.mxu0 0.0
        %607 = vmatpush1.msra.mxu0 %v590
        %608 = vmatprep.subr.mxu0 0.0
        %609 = vmatpush1.msra.mxu0 %v591
        %610 = vmatprep.subr.mxu0 0.0
        %611 = vmatpush1.msra.mxu0 %v592
        %612 = vmatprep.subr.mxu0 0.0
        %613 = vmatpush1.msra.mxu0 0.0
        %614 = vmatprep.subr.mxu0 0.0
        %615 = vmatpush1.msra.mxu0 0.0
        %616 = vmatprep.subr.mxu0 0.0
        %617 = vmatpush1.msra.mxu0 0.0
        %618 = vmatprep.subr.mxu0 0.0
        %619 = vmatpush1.msra.mxu0 0.0
        %620 = vmatprep.subr.mxu0 0.0
        %621 = vmatpush1.msra.mxu0 0.0
        %622 = vmatprep.subr.mxu0 0.0
        %623 = vmatpush1.msra.mxu0 0.0
        %624 = vmatprep.subr.mxu0 0.0
        %625 = vmatpush1.msra.mxu0 0.0
        %626 = vmatprep.subr.mxu0 0.0
        %627 = vmatpush1.msra.mxu0 0.0
        %628 = vmatprep.subr.mxu0 0.0
        %629 = vmatpush1.msra.mxu0 0.0
        %630 = vmatprep.subr.mxu0 0.0
        %631 = vmatpush1.msra.mxu0 0.0
        %632 = vmatprep.subr.mxu0 0.0
        %633 = vmatpush1.msra.mxu0 0.0
        %634 = vmatprep.subr.mxu0 0.0
        %635 = vmatpush1.msra.mxu0 0.0
        %636 = vmatprep.subr.mxu0 0.0
        %637 = vmatpush1.msra.mxu0 0.0
        %638 = vmatprep.subr.mxu0 0.0
        %639 = vmatpush1.msra.mxu0 0.0
        %640 = vmatprep.subr.mxu0 0.0
        %641 = vmatpush1.msra.mxu0 0.0
        %642 = vmatprep.subr.mxu0 0.0
        %643 = vmatpush1.msra.mxu0 0.0
        %644 = vmatprep.subr.mxu0 0.0
        %645 = vmatpush1.msra.mxu0 0.0
        %646 = vmatprep.subr.mxu0 0.0
        %647 = vmatpush1.msra.mxu0 0.0
        %648 = vmatprep.subr.mxu0 0.0
        %649 = vmatpush1.msra.mxu0 0.0
        %650 = vmatprep.subr.mxu0 0.0
        %651 = vmatpush1.msra.mxu0 0.0
        %652 = vmatprep.subr.mxu0 0.0
        %653 = vmatpush1.msra.mxu0 0.0
        %654 = vmatprep.subr.mxu0 0.0
        %655 = vmatpush1.msra.mxu0 0.0
        %656 = vmatprep.subr.mxu0 0.0
        %657 = vmatpush1.msra.mxu0 0.0
        %658 = vmatprep.subr.mxu0 0.0
        %659 = vmatpush1.msra.mxu0 0.0
        %660 = vmatprep.subr.mxu0 0.0
        %661 = vmatpush1.msra.mxu0 0.0
        %662 = vmatprep.subr.mxu0 0.0
        %663 = vmatpush1.msra.mxu0 0.0
        %664 = vmatprep.subr.mxu0 0.0
        %665 = vmatpush1.msra.mxu0 0.0
        %666 = vmatprep.subr.mxu0 0.0
        %667 = vmatpush1.msra.mxu0 0.0
        %668 = vmatprep.mubr.f32.mxu0 0.0
        %669 = vmatmul.mubr.f32.gmra.mrb[0].mxu0 %v602
        %v670 = vpop.f32.mrb[0].mxu0
        %v671 = vadd.f32 %v598, %v670
        %v672 = vpop.f32.mrb[0].mxu0
        %673 = vdwg.mxu0
        %v674 = vmul.f32 %v671, 0.35355338
        %s675 = sadd.s32 %s33, 8
        %v676 = vld [vmem:[#allocation12] sm:$0xff]
        %v677 = vld [vmem:[#allocation12 + $0x8] sm:$0xff]
        %v678 = vld [vmem:[#allocation12 + $0x10] sm:$0xff]
        %v679 = vld [vmem:[#allocation12 + $0x18] sm:$0xff]
        %v680 = vld [vmem:[#allocation12 + $0x20] sm:$0xff]
        %v681 = vld [vmem:[#allocation12 + $0x28] sm:$0xff]
        %v682 = vld [vmem:[#allocation12 + $0x30] sm:$0xff]
        %v683 = vld [vmem:[#allocation12 + $0x38] sm:$0xff]
        %v684 = vld [vmem:[#allocation12 + $0x40] sm:$0xff]
        %v685 = vld [vmem:[#allocation12 + $0x48] sm:$0xff]
        %v686 = vld [vmem:[#allocation12 + $0x50] sm:$0xff]
        %v687 = vld [vmem:[#allocation12 + $0x58] sm:$0xff]
        %v688 = vld [vmem:[#allocation12 + $0x60] sm:$0xff]
        %v689 = vld [vmem:[#allocation12 + $0x68] sm:$0xff]
        %v690 = vld [vmem:[#allocation12 + $0x70] sm:$0xff]
        %v691 = vld [vmem:[#allocation12 + $0x78] sm:$0xff]
        %v692 = vld [vmem:[#allocation14] sm:$0xff]
        %v693 = vld [vmem:[#allocation14 + $0x8] sm:$0xff]
        %v694 = vld [vmem:[#allocation14 + $0x10] sm:$0xff]
        %v695 = vld [vmem:[#allocation14 + $0x18] sm:$0xff]
        %v696 = vld [vmem:[#allocation14 + $0x20] sm:$0xff]
        %v697 = vld [vmem:[#allocation14 + $0x28] sm:$0xff]
        %v698 = vld [vmem:[#allocation14 + $0x30] sm:$0xff]
        %v699 = vld [vmem:[#allocation14 + $0x38] sm:$0xff]
        %v700 = vld [vmem:[#allocation14 + $0x40] sm:$0xff]
        %v701 = vld [vmem:[#allocation14 + $0x48] sm:$0xff]
        %v702 = vld [vmem:[#allocation14 + $0x50] sm:$0xff]
        %v703 = vld [vmem:[#allocation14 + $0x58] sm:$0xff]
        %v704 = vld [vmem:[#allocation14 + $0x60] sm:$0xff]
        %v705 = vld [vmem:[#allocation14 + $0x68] sm:$0xff]
        %v706 = vld [vmem:[#allocation14 + $0x70] sm:$0xff]
        %v707 = vld [vmem:[#allocation14 + $0x78] sm:$0xff]
        %v708 = vmul.f32 %v674, %v676
        %v709 = vmul.f32 %v674, %v677
        %v710 = vmul.f32 %v674, %v678
        %v711 = vmul.f32 %v674, %v679
        %v712 = vmul.f32 %v674, %v680
        %v713 = vmul.f32 %v674, %v681
        %v714 = vmul.f32 %v674, %v682
        %v715 = vmul.f32 %v674, %v683
        %v716 = vmul.f32 %v674, %v684
        %v717 = vmul.f32 %v674, %v685
        %v718 = vmul.f32 %v674, %v686
        %v719 = vmul.f32 %v674, %v687
        %v720 = vmul.f32 %v674, %v688
        %v721 = vmul.f32 %v674, %v689
        %v722 = vmul.f32 %v674, %v690
        %v723 = vmul.f32 %v674, %v691
        %v725 = vsel %vm600, %v708, 0
        %v728 = vsel %vm600, %v709, 0
        %v731 = vsel %vm600, %v710, 0
        %v734 = vsel %vm600, %v711, 0
        %v737 = vsel %vm600, %v712, 0
        %v740 = vsel %vm600, %v713, 0
        %v743 = vsel %vm600, %v714, 0
        %v746 = vsel %vm600, %v715, 0
        %v749 = vsel %vm600, %v716, 0
        %v752 = vsel %vm600, %v717, 0
        %v755 = vsel %vm600, %v718, 0
        %v758 = vsel %vm600, %v719, 0
        %v761 = vsel %vm600, %v720, 0
        %v764 = vsel %vm600, %v721, 0
        %v767 = vsel %vm600, %v722, 0
        %v770 = vsel %vm600, %v723, 0
        %772 = vmatprep.subr.mxu0 0.0
        %773 = vmatpush1.msra.mxu0 %v584
        %774 = vmatprep.subr.mxu0 0.0
        %775 = vmatpush1.msra.mxu0 %v585
        %776 = vmatprep.subr.mxu0 0.0
        %777 = vmatpush1.msra.mxu0 %v586
        %778 = vmatprep.subr.mxu0 0.0
        %779 = vmatpush1.msra.mxu0 %v587
        %780 = vmatprep.subr.mxu0 0.0
        %781 = vmatpush1.msra.mxu0 0.0
        %782 = vmatprep.subr.mxu0 0.0
        %783 = vmatpush1.msra.mxu0 0.0
        %784 = vmatprep.subr.mxu0 0.0
        %785 = vmatpush1.msra.mxu0 0.0
        %786 = vmatprep.subr.mxu0 0.0
        %787 = vmatpush1.msra.mxu0 0.0
        %788 = vmatprep.subr.mxu0 0.0
        %789 = vmatpush1.msra.mxu0 0.0
        %790 = vmatprep.subr.mxu0 0.0
        %791 = vmatpush1.msra.mxu0 0.0
        %792 = vmatprep.subr.mxu0 0.0
        %793 = vmatpush1.msra.mxu0 0.0
        %794 = vmatprep.subr.mxu0 0.0
        %795 = vmatpush1.msra.mxu0 0.0
        %796 = vmatprep.subr.mxu0 0.0
        %797 = vmatpush1.msra.mxu0 0.0
        %798 = vmatprep.subr.mxu0 0.0
        %799 = vmatpush1.msra.mxu0 0.0
        %800 = vmatprep.subr.mxu0 0.0
        %801 = vmatpush1.msra.mxu0 0.0
        %802 = vmatprep.subr.mxu0 0.0
        %803 = vmatpush1.msra.mxu0 0.0
        %804 = vmatprep.subr.mxu0 0.0
        %805 = vmatpush1.msra.mxu0 0.0
        %806 = vmatprep.subr.mxu0 0.0
        %807 = vmatpush1.msra.mxu0 0.0
        %808 = vmatprep.subr.mxu0 0.0
        %809 = vmatpush1.msra.mxu0 0.0
        %810 = vmatprep.subr.mxu0 0.0
        %811 = vmatpush1.msra.mxu0 0.0
        %812 = vmatprep.subr.mxu0 0.0
        %813 = vmatpush1.msra.mxu0 0.0
        %814 = vmatprep.subr.mxu0 0.0
        %815 = vmatpush1.msra.mxu0 0.0
        %816 = vmatprep.subr.mxu0 0.0
        %817 = vmatpush1.msra.mxu0 0.0
        %818 = vmatprep.subr.mxu0 0.0
        %819 = vmatpush1.msra.mxu0 0.0
        %820 = vmatprep.subr.mxu0 0.0
        %821 = vmatpush1.msra.mxu0 0.0
        %822 = vmatprep.subr.mxu0 0.0
        %823 = vmatpush1.msra.mxu0 0.0
        %824 = vmatprep.subr.mxu0 0.0
        %825 = vmatpush1.msra.mxu0 0.0
        %826 = vmatprep.subr.mxu0 0.0
        %827 = vmatpush1.msra.mxu0 0.0
        %828 = vmatprep.subr.mxu0 0.0
        %829 = vmatpush1.msra.mxu0 0.0
        %830 = vmatprep.subr.mxu0 0.0
        %831 = vmatpush1.msra.mxu0 0.0
        %832 = vmatprep.subr.mxu0 0.0
        %833 = vmatpush1.msra.mxu0 0.0
        %834 = vmatprep.subr.mxu0 0.0
        %835 = vmatpush1.msra.mxu0 0.0
        %836 = vmatprep.mubr.f32.mxu0 0.0
        %837 = vmatmul.mubr.f32.gmra.mrb[0].mxu0 %v725
        %v838 = vpop.f32.mrb[0].mxu0
        %v839 = vadd.f32 0.0, %v838
        %v840 = vpop.f32.mrb[0].mxu0
        %841 = vmatprep.mubr.f32.mxu0 0.0
        %842 = vmatmul.mubr.f32.gmra.mrb[0].mxu0 %v728
        %v843 = vpop.f32.mrb[0].mxu0
        %v844 = vadd.f32 0.0, %v843
        %v845 = vpop.f32.mrb[0].mxu0
        %846 = vmatprep.mubr.f32.mxu0 0.0
        %847 = vmatmul.mubr.f32.gmra.mrb[0].mxu0 %v731
        %v848 = vpop.f32.mrb[0].mxu0
        %v849 = vadd.f32 0.0, %v848
        %v850 = vpop.f32.mrb[0].mxu0
        %851 = vmatprep.mubr.f32.mxu0 0.0
        %852 = vmatmul.mubr.f32.gmra.mrb[0].mxu0 %v734
        %v853 = vpop.f32.mrb[0].mxu0
        %v854 = vadd.f32 0.0, %v853
        %v855 = vpop.f32.mrb[0].mxu0
        %856 = vmatprep.mubr.f32.mxu0 0.0
        %857 = vmatmul.mubr.f32.gmra.mrb[0].mxu0 %v737
        %v858 = vpop.f32.mrb[0].mxu0
        %v859 = vadd.f32 0.0, %v858
        %v860 = vpop.f32.mrb[0].mxu0
        %861 = vmatprep.mubr.f32.mxu0 0.0
        %862 = vmatmul.mubr.f32.gmra.mrb[0].mxu0 %v740
        %v863 = vpop.f32.mrb[0].mxu0
        %v864 = vadd.f32 0.0, %v863
        %v865 = vpop.f32.mrb[0].mxu0
        %866 = vmatprep.mubr.f32.mxu0 0.0
        %867 = vmatmul.mubr.f32.gmra.mrb[0].mxu0 %v743
        %v868 = vpop.f32.mrb[0].mxu0
        %v869 = vadd.f32 0.0, %v868
        %v870 = vpop.f32.mrb[0].mxu0
        %871 = vmatprep.mubr.f32.mxu0 0.0
        %872 = vmatmul.mubr.f32.gmra.mrb[0].mxu0 %v746
        %v873 = vpop.f32.mrb[0].mxu0
        %v874 = vadd.f32 0.0, %v873
        %v875 = vpop.f32.mrb[0].mxu0
        %876 = vmatprep.mubr.f32.mxu0 0.0
        %877 = vmatmul.mubr.f32.gmra.mrb[0].mxu0 %v749
        %v878 = vpop.f32.mrb[0].mxu0
        %v879 = vadd.f32 0.0, %v878
        %v880 = vpop.f32.mrb[0].mxu0
        %881 = vmatprep.mubr.f32.mxu0 0.0
        %882 = vmatmul.mubr.f32.gmra.mrb[0].mxu0 %v752
        %v883 = vpop.f32.mrb[0].mxu0
        %v884 = vadd.f32 0.0, %v883
        %v885 = vpop.f32.mrb[0].mxu0
        %886 = vmatprep.mubr.f32.mxu0 0.0
        %887 = vmatmul.mubr.f32.gmra.mrb[0].mxu0 %v755
        %v888 = vpop.f32.mrb[0].mxu0
        %v889 = vadd.f32 0.0, %v888
        %v890 = vpop.f32.mrb[0].mxu0
        %891 = vmatprep.mubr.f32.mxu0 0.0
        %892 = vmatmul.mubr.f32.gmra.mrb[0].mxu0 %v758
        %v893 = vpop.f32.mrb[0].mxu0
        %v894 = vadd.f32 0.0, %v893
        %v895 = vpop.f32.mrb[0].mxu0
        %896 = vmatprep.mubr.f32.mxu0 0.0
        %897 = vmatmul.mubr.f32.gmra.mrb[0].mxu0 %v761
        %v898 = vpop.f32.mrb[0].mxu0
        %v899 = vadd.f32 0.0, %v898
        %v900 = vpop.f32.mrb[0].mxu0
        %901 = vmatprep.mubr.f32.mxu0 0.0
        %902 = vmatmul.mubr.f32.gmra.mrb[0].mxu0 %v764
        %v903 = vpop.f32.mrb[0].mxu0
        %v904 = vadd.f32 0.0, %v903
        %v905 = vpop.f32.mrb[0].mxu0
        %906 = vmatprep.mubr.f32.mxu0 0.0
        %907 = vmatmul.mubr.f32.gmra.mrb[0].mxu0 %v767
        %v908 = vpop.f32.mrb[0].mxu0
        %v909 = vadd.f32 0.0, %v908
        %v910 = vpop.f32.mrb[0].mxu0
        %911 = vmatprep.mubr.f32.mxu0 0.0
        %912 = vmatmul.mubr.f32.gmra.mrb[0].mxu0 %v770
        %v913 = vpop.f32.mrb[0].mxu0
        %v914 = vadd.f32 0.0, %v913
        %v915 = vpop.f32.mrb[0].mxu0
        %916 = vdwg.mxu0
        %v917 = vstv %s675
        %vm918 = vcmp.gt.s32.totalorder %v917, 0
        %vm919 = vcmp.gt.s32.totalorder %v917, 1
        %vm920 = vcmp.gt.s32.totalorder %v917, 2
        %vm921 = vcmp.gt.s32.totalorder %v917, 3
        %vm922 = vcmp.gt.s32.totalorder %v917, 4
        %vm923 = vcmp.gt.s32.totalorder %v917, 5
        %vm924 = vcmp.gt.s32.totalorder %v917, 6
        %vm925 = vcmp.gt.s32.totalorder %v917, 7
        %vm926 = vcmp.gt.s32.totalorder %v917, 8
        %vm927 = vcmp.gt.s32.totalorder %v917, 9
        %vm928 = vcmp.gt.s32.totalorder %v917, 10
        %vm929 = vcmp.gt.s32.totalorder %v917, 11
        %vm930 = vcmp.gt.s32.totalorder %v917, 12
        %vm931 = vcmp.gt.s32.totalorder %v917, 13
        %vm932 = vcmp.gt.s32.totalorder %v917, 14
        %vm933 = vcmp.gt.s32.totalorder %v917, 15
        %v934 = vsel %vm918, %v839, -inf
        %v935 = vsel %vm919, %v844, -inf
        %v936 = vsel %vm920, %v849, -inf
        %v937 = vsel %vm921, %v854, -inf
        %v938 = vsel %vm922, %v859, -inf
        %v939 = vsel %vm923, %v864, -inf
        %v940 = vsel %vm924, %v869, -inf
        %v941 = vsel %vm925, %v874, -inf
        %v942 = vsel %vm926, %v879, -inf
        %v943 = vsel %vm927, %v884, -inf
        %v944 = vsel %vm928, %v889, -inf
        %v945 = vsel %vm929, %v894, -inf
        %v946 = vsel %vm930, %v899, -inf
        %v947 = vsel %vm931, %v904, -inf
        %v948 = vsel %vm932, %v909, -inf
        %v949 = vsel %vm933, %v914, -inf
        %951 = vrot.lane.b32.xlu0 %v671, 96
        %v952 = vpop.permute.xlu0 %951
        %v954 = vmul.f32 %v674, %v952
        %v956 = vsel %vm600, %v954, 0
        %958 = vmatprep.subr.mxu0 0.0
        %959 = vmatpush1.msra.mxu0 %v584
        %960 = vmatprep.subr.mxu0 0.0
        %961 = vmatpush1.msra.mxu0 %v585
        %962 = vmatprep.subr.mxu0 0.0
        %963 = vmatpush1.msra.mxu0 %v586
        %964 = vmatprep.subr.mxu0 0.0
        %965 = vmatpush1.msra.mxu0 %v587
        %966 = vmatprep.subr.mxu0 0.0
        %967 = vmatpush1.msra.mxu0 0.0
        %968 = vmatprep.subr.mxu0 0.0
        %969 = vmatpush1.msra.mxu0 0.0
        %970 = vmatprep.subr.mxu0 0.0
        %971 = vmatpush1.msra.mxu0 0.0
        %972 = vmatprep.subr.mxu0 0.0
        %973 = vmatpush1.msra.mxu0 0.0
        %974 = vmatprep.subr.mxu0 0.0
        %975 = vmatpush1.msra.mxu0 0.0
        %976 = vmatprep.subr.mxu0 0.0
        %977 = vmatpush1.msra.mxu0 0.0
        %978 = vmatprep.subr.mxu0 0.0
        %979 = vmatpush1.msra.mxu0 0.0
        %980 = vmatprep.subr.mxu0 0.0
        %981 = vmatpush1.msra.mxu0 0.0
        %982 = vmatprep.subr.mxu0 0.0
        %983 = vmatpush1.msra.mxu0 0.0
        %984 = vmatprep.subr.mxu0 0.0
        %985 = vmatpush1.msra.mxu0 0.0
        %986 = vmatprep.subr.mxu0 0.0
        %987 = vmatpush1.msra.mxu0 0.0
        %988 = vmatprep.subr.mxu0 0.0
        %989 = vmatpush1.msra.mxu0 0.0
        %990 = vmatprep.subr.mxu0 0.0
        %991 = vmatpush1.msra.mxu0 0.0
        %992 = vmatprep.subr.mxu0 0.0
        %993 = vmatpush1.msra.mxu0 0.0
        %994 = vmatprep.subr.mxu0 0.0
        %995 = vmatpush1.msra.mxu0 0.0
        %996 = vmatprep.subr.mxu0 0.0
        %997 = vmatpush1.msra.mxu0 0.0
        %998 = vmatprep.subr.mxu0 0.0
        %999 = vmatpush1.msra.mxu0 0.0
        %1000 = vmatprep.subr.mxu0 0.0
        %1001 = vmatpush1.msra.mxu0 0.0
        %1002 = vmatprep.subr.mxu0 0.0
        %1003 = vmatpush1.msra.mxu0 0.0
        %1004 = vmatprep.subr.mxu0 0.0
        %1005 = vmatpush1.msra.mxu0 0.0
        %1006 = vmatprep.subr.mxu0 0.0
        %1007 = vmatpush1.msra.mxu0 0.0
        %1008 = vmatprep.subr.mxu0 0.0
        %1009 = vmatpush1.msra.mxu0 0.0
        %1010 = vmatprep.subr.mxu0 0.0
        %1011 = vmatpush1.msra.mxu0 0.0
        %1012 = vmatprep.subr.mxu0 0.0
        %1013 = vmatpush1.msra.mxu0 0.0
        %1014 = vmatprep.subr.mxu0 0.0
        %1015 = vmatpush1.msra.mxu0 0.0
        %1016 = vmatprep.subr.mxu0 0.0
        %1017 = vmatpush1.msra.mxu0 0.0
        %1018 = vmatprep.subr.mxu0 0.0
        %1019 = vmatpush1.msra.mxu0 0.0
        %1020 = vmatprep.subr.mxu0 0.0
        %1021 = vmatpush1.msra.mxu0 0.0
        %1022 = vmatprep.mubr.f32.mxu0 0.0
        %1023 = vmatmul.mubr.f32.gmra.mrb[0].mxu0 %v956
        %v1024 = vpop.f32.mrb[0].mxu0
        %v1025 = vadd.f32 0.0, %v1024
        %v1026 = vpop.f32.mrb[0].mxu0
        %1027 = vdwg.mxu0
        %vm1028 = vcmask 31744
        %v1029 = vsel %vm1028, %v934, -inf
        %v1030 = vsel %vm1028, %v935, -inf
        %v1031 = vsel %vm1028, %v936, -inf
        %v1032 = vsel %vm1028, %v937, -inf
        %v1033 = vsel %vm1028, %v938, -inf
        %v1034 = vmax.f32 %v1029, %v1033
        %v1035 = vsel %vm1028, %v939, -inf
        %v1036 = vmax.f32 %v1030, %v1035
        %v1037 = vsel %vm1028, %v940, -inf
        %v1038 = vmax.f32 %v1031, %v1037
        %v1039 = vsel %vm1028, %v941, -inf
        %v1040 = vmax.f32 %v1032, %v1039
        %v1041 = vsel %vm1028, %v942, -inf
        %v1042 = vmax.f32 %v1034, %v1041
        %v1043 = vsel %vm1028, %v943, -inf
        %v1044 = vmax.f32 %v1036, %v1043
        %v1045 = vsel %vm1028, %v944, -inf
        %v1046 = vmax.f32 %v1038, %v1045
        %v1047 = vsel %vm1028, %v945, -inf
        %v1048 = vmax.f32 %v1040, %v1047
        %v1049 = vsel %vm1028, %v946, -inf
        %v1050 = vmax.f32 %v1042, %v1049
        %v1051 = vsel %vm1028, %v947, -inf
        %v1052 = vmax.f32 %v1044, %v1051
        %v1053 = vsel %vm1028, %v948, -inf
        %v1054 = vmax.f32 %v1046, %v1053
        %v1055 = vsel %vm1028, %v949, -inf
        %v1056 = vmax.f32 %v1048, %v1055
        %v1057 = vmax.f32 %v1050, %v1052
        %v1058 = vmax.f32 %v1054, %v1056
        %v1059 = vmax.f32 %v1057, %v1058
        %v1060 = vmax.f32 %v1059, %v1025
        %v1061 = vsub.f32 %v934, %v1060
        %v1062 = vsub.f32 %v935, %v1060
        %v1063 = vsub.f32 %v936, %v1060
        %v1064 = vsub.f32 %v937, %v1060
        %v1065 = vsub.f32 %v938, %v1060
        %v1066 = vsub.f32 %v939, %v1060
        %v1067 = vsub.f32 %v940, %v1060
        %v1068 = vsub.f32 %v941, %v1060
        %v1069 = vsub.f32 %v942, %v1060
        %v1070 = vsub.f32 %v943, %v1060
        %v1071 = vsub.f32 %v944, %v1060
        %v1072 = vsub.f32 %v945, %v1060
        %v1073 = vsub.f32 %v946, %v1060
        %v1074 = vsub.f32 %v947, %v1060
        %v1075 = vsub.f32 %v948, %v1060
        %v1076 = vsub.f32 %v949, %v1060
        %v1077 = vmul.f32 %v1061, 1.442695
        %v1078 = vpow.pop %v1077
        %v1079 = vmul.f32 %v1062, 1.442695
        %v1080 = vpow.pop %v1079
        %v1081 = vmul.f32 %v1063, 1.442695
        %v1082 = vpow.pop %v1081
        %v1083 = vmul.f32 %v1064, 1.442695
        %v1084 = vpow.pop %v1083
        %v1085 = vmul.f32 %v1065, 1.442695
        %v1086 = vpow.pop %v1085
        %v1087 = vmul.f32 %v1066, 1.442695
        %v1088 = vpow.pop %v1087
        %v1089 = vmul.f32 %v1067, 1.442695
        %v1090 = vpow.pop %v1089
        %v1091 = vmul.f32 %v1068, 1.442695
        %v1092 = vpow.pop %v1091
        %v1093 = vmul.f32 %v1069, 1.442695
        %v1094 = vpow.pop %v1093
        %v1095 = vmul.f32 %v1070, 1.442695
        %v1096 = vpow.pop %v1095
        %v1097 = vmul.f32 %v1071, 1.442695
        %v1098 = vpow.pop %v1097
        %v1099 = vmul.f32 %v1072, 1.442695
        %v1100 = vpow.pop %v1099
        %v1101 = vmul.f32 %v1073, 1.442695
        %v1102 = vpow.pop %v1101
        %v1103 = vmul.f32 %v1074, 1.442695
        %v1104 = vpow.pop %v1103
        %v1105 = vmul.f32 %v1075, 1.442695
        %v1106 = vpow.pop %v1105
        %v1107 = vmul.f32 %v1076, 1.442695
        %v1108 = vpow.pop %v1107
        %v1109 = vsub.f32 %v1025, %v1060
        %v1110 = vmul.f32 %v1109, 1.442695
        %v1111 = vpow.pop %v1110
        %v1112 = vsel %vm1028, %v1078, 0.0
        %v1113 = vsel %vm1028, %v1080, 0.0
        %v1114 = vadd.f32 %v1112, %v1113
        %v1115 = vsel %vm1028, %v1082, 0.0
        %v1116 = vadd.f32 %v1114, %v1115
        %v1117 = vsel %vm1028, %v1084, 0.0
        %v1118 = vadd.f32 %v1116, %v1117
        %v1119 = vsel %vm1028, %v1086, 0.0
        %v1120 = vadd.f32 %v1118, %v1119
        %v1121 = vsel %vm1028, %v1088, 0.0
        %v1122 = vadd.f32 %v1120, %v1121
        %v1123 = vsel %vm1028, %v1090, 0.0
        %v1124 = vadd.f32 %v1122, %v1123
        %v1125 = vsel %vm1028, %v1092, 0.0
        %v1126 = vadd.f32 %v1124, %v1125
        %v1127 = vsel %vm1028, %v1094, 0.0
        %v1128 = vadd.f32 %v1126, %v1127
        %v1129 = vsel %vm1028, %v1096, 0.0
        %v1130 = vadd.f32 %v1128, %v1129
        %v1131 = vsel %vm1028, %v1098, 0.0
        %v1132 = vadd.f32 %v1130, %v1131
        %v1133 = vsel %vm1028, %v1100, 0.0
        %v1134 = vadd.f32 %v1132, %v1133
        %v1135 = vsel %vm1028, %v1102, 0.0
        %v1136 = vadd.f32 %v1134, %v1135
        %v1137 = vsel %vm1028, %v1104, 0.0
        %v1138 = vadd.f32 %v1136, %v1137
        %v1139 = vsel %vm1028, %v1106, 0.0
        %v1140 = vadd.f32 %v1138, %v1139
        %v1141 = vsel %vm1028, %v1108, 0.0
        %v1142 = vadd.f32 %v1140, %v1141
        %v1143 = vadd.f32 %v1142, %v1111
        %v1144 = vrcp.pop %v1143
        %v1146 = vsel %vm1028, %v1078, 0
        %v1149 = vsel %vm1028, %v1080, 0
        %v1152 = vsel %vm1028, %v1082, 0
        %v1155 = vsel %vm1028, %v1084, 0
        %v1158 = vsel %vm1028, %v1086, 0
        %v1161 = vsel %vm1028, %v1088, 0
        %v1164 = vsel %vm1028, %v1090, 0
        %v1167 = vsel %vm1028, %v1092, 0
        %v1170 = vsel %vm1028, %v1094, 0
        %v1173 = vsel %vm1028, %v1096, 0
        %v1176 = vsel %vm1028, %v1098, 0
        %v1179 = vsel %vm1028, %v1100, 0
        %v1182 = vsel %vm1028, %v1102, 0
        %v1185 = vsel %vm1028, %v1104, 0
        %v1188 = vsel %vm1028, %v1106, 0
        %v1191 = vsel %vm1028, %v1108, 0
        %vm1193 = vcmask 1043456
        %v1195 = vsel %vm1193, %v588, 0
        %1197 = vmatprep.subr.mxu0 0.0
        %1198 = vmatpush1.msra.mxu0 %v1195
        %1199 = vmatprep.subr.mxu0 0.0
        %1200 = vmatpush1.msra.mxu0 0.0
        %1201 = vmatprep.subr.mxu0 0.0
        %1202 = vmatpush1.msra.mxu0 0.0
        %1203 = vmatprep.subr.mxu0 0.0
        %1204 = vmatpush1.msra.mxu0 0.0
        %1205 = vmatprep.subr.mxu0 0.0
        %1206 = vmatpush1.msra.mxu0 0.0
        %1207 = vmatprep.subr.mxu0 0.0
        %1208 = vmatpush1.msra.mxu0 0.0
        %1209 = vmatprep.subr.mxu0 0.0
        %1210 = vmatpush1.msra.mxu0 0.0
        %1211 = vmatprep.subr.mxu0 0.0
        %1212 = vmatpush1.msra.mxu0 0.0
        %1213 = vmatprep.subr.mxu0 0.0
        %1214 = vmatpush1.msra.mxu0 0.0
        %1215 = vmatprep.subr.mxu0 0.0
        %1216 = vmatpush1.msra.mxu0 0.0
        %1217 = vmatprep.subr.mxu0 0.0
        %1218 = vmatpush1.msra.mxu0 0.0
        %1219 = vmatprep.subr.mxu0 0.0
        %1220 = vmatpush1.msra.mxu0 0.0
        %1221 = vmatprep.subr.mxu0 0.0
        %1222 = vmatpush1.msra.mxu0 0.0
        %1223 = vmatprep.subr.mxu0 0.0
        %1224 = vmatpush1.msra.mxu0 0.0
        %1225 = vmatprep.subr.mxu0 0.0
        %1226 = vmatpush1.msra.mxu0 0.0
        %1227 = vmatprep.subr.mxu0 0.0
        %1228 = vmatpush1.msra.mxu0 0.0
        %1229 = vmatprep.subr.mxu0 0.0
        %1230 = vmatpush1.msra.mxu0 0.0
        %1231 = vmatprep.subr.mxu0 0.0
        %1232 = vmatpush1.msra.mxu0 0.0
        %1233 = vmatprep.subr.mxu0 0.0
        %1234 = vmatpush1.msra.mxu0 0.0
        %1235 = vmatprep.subr.mxu0 0.0
        %1236 = vmatpush1.msra.mxu0 0.0
        %1237 = vmatprep.subr.mxu0 0.0
        %1238 = vmatpush1.msra.mxu0 0.0
        %1239 = vmatprep.subr.mxu0 0.0
        %1240 = vmatpush1.msra.mxu0 0.0
        %1241 = vmatprep.subr.mxu0 0.0
        %1242 = vmatpush1.msra.mxu0 0.0
        %1243 = vmatprep.subr.mxu0 0.0
        %1244 = vmatpush1.msra.mxu0 0.0
        %1245 = vmatprep.subr.mxu0 0.0
        %1246 = vmatpush1.msra.mxu0 0.0
        %1247 = vmatprep.subr.mxu0 0.0
        %1248 = vmatpush1.msra.mxu0 0.0
        %1249 = vmatprep.subr.mxu0 0.0
        %1250 = vmatpush1.msra.mxu0 0.0
        %1251 = vmatprep.subr.mxu0 0.0
        %1252 = vmatpush1.msra.mxu0 0.0
        %1253 = vmatprep.subr.mxu0 0.0
        %1254 = vmatpush1.msra.mxu0 0.0
        %1255 = vmatprep.subr.mxu0 0.0
        %1256 = vmatpush1.msra.mxu0 0.0
        %1257 = vmatprep.subr.mxu0 0.0
        %1258 = vmatpush1.msra.mxu0 0.0
        %1259 = vmatprep.subr.mxu0 0.0
        %1260 = vmatpush1.msra.mxu0 0.0
        %1261 = vmatprep.mubr.f32.mxu0 0.0
        %1262 = vmatmul.mubr.f32.gmra.mrb[0].mxu0 %v1146
        %v1263 = vpop.f32.mrb[0].mxu0
        %v1264 = vadd.f32 0.0, %v1263
        %v1265 = vpop.f32.mrb[0].mxu0
        %1266 = vmatprep.mubr.f32.mxu0 0.0
        %1267 = vmatmul.mubr.f32.gmra.mrb[0].mxu0 %v1149
        %v1268 = vpop.f32.mrb[0].mxu0
        %v1269 = vadd.f32 0.0, %v1268
        %v1270 = vpop.f32.mrb[0].mxu0
        %1271 = vmatprep.mubr.f32.mxu0 0.0
        %1272 = vmatmul.mubr.f32.gmra.mrb[0].mxu0 %v1152
        %v1273 = vpop.f32.mrb[0].mxu0
        %v1274 = vadd.f32 0.0, %v1273
        %v1275 = vpop.f32.mrb[0].mxu0
        %1276 = vmatprep.mubr.f32.mxu0 0.0
        %1277 = vmatmul.mubr.f32.gmra.mrb[0].mxu0 %v1155
        %v1278 = vpop.f32.mrb[0].mxu0
        %v1279 = vadd.f32 0.0, %v1278
        %v1280 = vpop.f32.mrb[0].mxu0
        %1281 = vmatprep.mubr.f32.mxu0 0.0
        %1282 = vmatmul.mubr.f32.gmra.mrb[0].mxu0 %v1158
        %v1283 = vpop.f32.mrb[0].mxu0
        %v1284 = vadd.f32 0.0, %v1283
        %v1285 = vpop.f32.mrb[0].mxu0
        %1286 = vmatprep.mubr.f32.mxu0 0.0
        %1287 = vmatmul.mubr.f32.gmra.mrb[0].mxu0 %v1161
        %v1288 = vpop.f32.mrb[0].mxu0
        %v1289 = vadd.f32 0.0, %v1288
        %v1290 = vpop.f32.mrb[0].mxu0
        %1291 = vmatprep.mubr.f32.mxu0 0.0
        %1292 = vmatmul.mubr.f32.gmra.mrb[0].mxu0 %v1164
        %v1293 = vpop.f32.mrb[0].mxu0
        %v1294 = vadd.f32 0.0, %v1293
        %v1295 = vpop.f32.mrb[0].mxu0
        %1296 = vmatprep.mubr.f32.mxu0 0.0
        %1297 = vmatmul.mubr.f32.gmra.mrb[0].mxu0 %v1167
        %v1298 = vpop.f32.mrb[0].mxu0
        %v1299 = vadd.f32 0.0, %v1298
        %v1300 = vpop.f32.mrb[0].mxu0
        %1301 = vmatprep.mubr.f32.mxu0 0.0
        %1302 = vmatmul.mubr.f32.gmra.mrb[0].mxu0 %v1170
        %v1303 = vpop.f32.mrb[0].mxu0
        %v1304 = vadd.f32 0.0, %v1303
        %v1305 = vpop.f32.mrb[0].mxu0
        %1306 = vmatprep.mubr.f32.mxu0 0.0
        %1307 = vmatmul.mubr.f32.gmra.mrb[0].mxu0 %v1173
        %v1308 = vpop.f32.mrb[0].mxu0
        %v1309 = vadd.f32 0.0, %v1308
        %v1310 = vpop.f32.mrb[0].mxu0
        %1311 = vmatprep.mubr.f32.mxu0 0.0
        %1312 = vmatmul.mubr.f32.gmra.mrb[0].mxu0 %v1176
        %v1313 = vpop.f32.mrb[0].mxu0
        %v1314 = vadd.f32 0.0, %v1313
        %v1315 = vpop.f32.mrb[0].mxu0
        %1316 = vmatprep.mubr.f32.mxu0 0.0
        %1317 = vmatmul.mubr.f32.gmra.mrb[0].mxu0 %v1179
        %v1318 = vpop.f32.mrb[0].mxu0
        %v1319 = vadd.f32 0.0, %v1318
        %v1320 = vpop.f32.mrb[0].mxu0
        %1321 = vmatprep.mubr.f32.mxu0 0.0
        %1322 = vmatmul.mubr.f32.gmra.mrb[0].mxu0 %v1182
        %v1323 = vpop.f32.mrb[0].mxu0
        %v1324 = vadd.f32 0.0, %v1323
        %v1325 = vpop.f32.mrb[0].mxu0
        %1326 = vmatprep.mubr.f32.mxu0 0.0
        %1327 = vmatmul.mubr.f32.gmra.mrb[0].mxu0 %v1185
        %v1328 = vpop.f32.mrb[0].mxu0
        %v1329 = vadd.f32 0.0, %v1328
        %v1330 = vpop.f32.mrb[0].mxu0
        %1331 = vmatprep.mubr.f32.mxu0 0.0
        %1332 = vmatmul.mubr.f32.gmra.mrb[0].mxu0 %v1188
        %v1333 = vpop.f32.mrb[0].mxu0
        %v1334 = vadd.f32 0.0, %v1333
        %v1335 = vpop.f32.mrb[0].mxu0
        %1336 = vmatprep.mubr.f32.mxu0 0.0
        %1337 = vmatmul.mubr.f32.gmra.mrb[0].mxu0 %v1191
        %v1338 = vpop.f32.mrb[0].mxu0
        %v1339 = vadd.f32 0.0, %v1338
        %v1340 = vpop.f32.mrb[0].mxu0
        %1341 = vdwg.mxu0
        %v1343 = vsel %vm1028, %v1144, 0
        %1345 = vmatprep.subr.mxu0 0.0
        %1346 = vmatpush1.msra.mxu0 %v1195
        %1347 = vmatprep.subr.mxu0 0.0
        %1348 = vmatpush1.msra.mxu0 0.0
        %1349 = vmatprep.subr.mxu0 0.0
        %1350 = vmatpush1.msra.mxu0 0.0
        %1351 = vmatprep.subr.mxu0 0.0
        %1352 = vmatpush1.msra.mxu0 0.0
        %1353 = vmatprep.subr.mxu0 0.0
        %1354 = vmatpush1.msra.mxu0 0.0
        %1355 = vmatprep.subr.mxu0 0.0
        %1356 = vmatpush1.msra.mxu0 0.0
        %1357 = vmatprep.subr.mxu0 0.0
        %1358 = vmatpush1.msra.mxu0 0.0
        %1359 = vmatprep.subr.mxu0 0.0
        %1360 = vmatpush1.msra.mxu0 0.0
        %1361 = vmatprep.subr.mxu0 0.0
        %1362 = vmatpush1.msra.mxu0 0.0
        %1363 = vmatprep.subr.mxu0 0.0
        %1364 = vmatpush1.msra.mxu0 0.0
        %1365 = vmatprep.subr.mxu0 0.0
        %1366 = vmatpush1.msra.mxu0 0.0
        %1367 = vmatprep.subr.mxu0 0.0
        %1368 = vmatpush1.msra.mxu0 0.0
        %1369 = vmatprep.subr.mxu0 0.0
        %1370 = vmatpush1.msra.mxu0 0.0
        %1371 = vmatprep.subr.mxu0 0.0
        %1372 = vmatpush1.msra.mxu0 0.0
        %1373 = vmatprep.subr.mxu0 0.0
        %1374 = vmatpush1.msra.mxu0 0.0
        %1375 = vmatprep.subr.mxu0 0.0
        %1376 = vmatpush1.msra.mxu0 0.0
        %1377 = vmatprep.subr.mxu0 0.0
        %1378 = vmatpush1.msra.mxu0 0.0
        %1379 = vmatprep.subr.mxu0 0.0
        %1380 = vmatpush1.msra.mxu0 0.0
        %1381 = vmatprep.subr.mxu0 0.0
        %1382 = vmatpush1.msra.mxu0 0.0
        %1383 = vmatprep.subr.mxu0 0.0
        %1384 = vmatpush1.msra.mxu0 0.0
        %1385 = vmatprep.subr.mxu0 0.0
        %1386 = vmatpush1.msra.mxu0 0.0
        %1387 = vmatprep.subr.mxu0 0.0
        %1388 = vmatpush1.msra.mxu0 0.0
        %1389 = vmatprep.subr.mxu0 0.0
        %1390 = vmatpush1.msra.mxu0 0.0
        %1391 = vmatprep.subr.mxu0 0.0
        %1392 = vmatpush1.msra.mxu0 0.0
        %1393 = vmatprep.subr.mxu0 0.0
        %1394 = vmatpush1.msra.mxu0 0.0
        %1395 = vmatprep.subr.mxu0 0.0
        %1396 = vmatpush1.msra.mxu0 0.0
        %1397 = vmatprep.subr.mxu0 0.0
        %1398 = vmatpush1.msra.mxu0 0.0
        %1399 = vmatprep.subr.mxu0 0.0
        %1400 = vmatpush1.msra.mxu0 0.0
        %1401 = vmatprep.subr.mxu0 0.0
        %1402 = vmatpush1.msra.mxu0 0.0
        %1403 = vmatprep.subr.mxu0 0.0
        %1404 = vmatpush1.msra.mxu0 0.0
        %1405 = vmatprep.subr.mxu0 0.0
        %1406 = vmatpush1.msra.mxu0 0.0
        %1407 = vmatprep.subr.mxu0 0.0
        %1408 = vmatpush1.msra.mxu0 0.0
        %1409 = vmatprep.mubr.f32.mxu0 0.0
        %1410 = vmatmul.mubr.f32.gmra.mrb[0].mxu0 %v1343
        %v1411 = vpop.f32.mrb[0].mxu0
        %v1412 = vadd.f32 0.0, %v1411
        %v1413 = vpop.f32.mrb[0].mxu0
        %1414 = vdwg.mxu0
        %v1415 = vmul.f32 %v1111, %v1144
        %v1417 = vsel %vm1028, %v1415, 0
        %1419 = vmatprep.subr.mxu0 0.0
        %1420 = vmatpush1.msra.mxu0 %v1195
        %1421 = vmatprep.subr.mxu0 0.0
        %1422 = vmatpush1.msra.mxu0 0.0
        %1423 = vmatprep.subr.mxu0 0.0
        %1424 = vmatpush1.msra.mxu0 0.0
        %1425 = vmatprep.subr.mxu0 0.0
        %1426 = vmatpush1.msra.mxu0 0.0
        %1427 = vmatprep.subr.mxu0 0.0
        %1428 = vmatpush1.msra.mxu0 0.0
        %1429 = vmatprep.subr.mxu0 0.0
        %1430 = vmatpush1.msra.mxu0 0.0
        %1431 = vmatprep.subr.mxu0 0.0
        %1432 = vmatpush1.msra.mxu0 0.0
        %1433 = vmatprep.subr.mxu0 0.0
        %1434 = vmatpush1.msra.mxu0 0.0
        %1435 = vmatprep.subr.mxu0 0.0
        %1436 = vmatpush1.msra.mxu0 0.0
        %1437 = vmatprep.subr.mxu0 0.0
        %1438 = vmatpush1.msra.mxu0 0.0
        %1439 = vmatprep.subr.mxu0 0.0
        %1440 = vmatpush1.msra.mxu0 0.0
        %1441 = vmatprep.subr.mxu0 0.0
        %1442 = vmatpush1.msra.mxu0 0.0
        %1443 = vmatprep.subr.mxu0 0.0
        %1444 = vmatpush1.msra.mxu0 0.0
        %1445 = vmatprep.subr.mxu0 0.0
        %1446 = vmatpush1.msra.mxu0 0.0
        %1447 = vmatprep.subr.mxu0 0.0
        %1448 = vmatpush1.msra.mxu0 0.0
        %1449 = vmatprep.subr.mxu0 0.0
        %1450 = vmatpush1.msra.mxu0 0.0
        %1451 = vmatprep.subr.mxu0 0.0
        %1452 = vmatpush1.msra.mxu0 0.0
        %1453 = vmatprep.subr.mxu0 0.0
        %1454 = vmatpush1.msra.mxu0 0.0
        %1455 = vmatprep.subr.mxu0 0.0
        %1456 = vmatpush1.msra.mxu0 0.0
        %1457 = vmatprep.subr.mxu0 0.0
        %1458 = vmatpush1.msra.mxu0 0.0
        %1459 = vmatprep.subr.mxu0 0.0
        %1460 = vmatpush1.msra.mxu0 0.0
        %1461 = vmatprep.subr.mxu0 0.0
        %1462 = vmatpush1.msra.mxu0 0.0
        %1463 = vmatprep.subr.mxu0 0.0
        %1464 = vmatpush1.msra.mxu0 0.0
        %1465 = vmatprep.subr.mxu0 0.0
        %1466 = vmatpush1.msra.mxu0 0.0
        %1467 = vmatprep.subr.mxu0 0.0
        %1468 = vmatpush1.msra.mxu0 0.0
        %1469 = vmatprep.subr.mxu0 0.0
        %1470 = vmatpush1.msra.mxu0 0.0
        %1471 = vmatprep.subr.mxu0 0.0
        %1472 = vmatpush1.msra.mxu0 0.0
        %1473 = vmatprep.subr.mxu0 0.0
        %1474 = vmatpush1.msra.mxu0 0.0
        %1475 = vmatprep.subr.mxu0 0.0
        %1476 = vmatpush1.msra.mxu0 0.0
        %1477 = vmatprep.subr.mxu0 0.0
        %1478 = vmatpush1.msra.mxu0 0.0
        %1479 = vmatprep.subr.mxu0 0.0
        %1480 = vmatpush1.msra.mxu0 0.0
        %1481 = vmatprep.subr.mxu0 0.0
        %1482 = vmatpush1.msra.mxu0 0.0
        %1483 = vmatprep.mubr.f32.mxu0 0.0
        %1484 = vmatmul.mubr.f32.gmra.mrb[0].mxu0 %v1417
        %v1485 = vpop.f32.mrb[0].mxu0
        %v1486 = vadd.f32 0.0, %v1485
        %v1487 = vpop.f32.mrb[0].mxu0
        %1488 = vdwg.mxu0
        %v1489 = vmul.f32 %v1264, %v692
        %v1490 = vmul.f32 %v1269, %v693
        %v1491 = vmul.f32 %v1274, %v694
        %v1492 = vmul.f32 %v1279, %v695
        %v1493 = vmul.f32 %v1284, %v696
        %v1494 = vmul.f32 %v1289, %v697
        %v1495 = vmul.f32 %v1294, %v698
        %v1496 = vmul.f32 %v1299, %v699
        %v1497 = vmul.f32 %v1304, %v700
        %v1498 = vmul.f32 %v1309, %v701
        %v1499 = vmul.f32 %v1314, %v702
        %v1500 = vmul.f32 %v1319, %v703
        %v1501 = vmul.f32 %v1324, %v704
        %v1502 = vmul.f32 %v1329, %v705
        %v1503 = vmul.f32 %v1334, %v706
        %v1504 = vmul.f32 %v1339, %v707
        %v1505 = vsel %vm600, %v1489, 0.0
        %v1506 = vsel %vm600, %v1490, 0.0
        %v1507 = vadd.f32 %v1505, %v1506
        %v1508 = vsel %vm600, %v1491, 0.0
        %v1509 = vadd.f32 %v1507, %v1508
        %v1510 = vsel %vm600, %v1492, 0.0
        %v1511 = vadd.f32 %v1509, %v1510
        %v1512 = vsel %vm600, %v1493, 0.0
        %v1513 = vadd.f32 %v1511, %v1512
        %v1514 = vsel %vm600, %v1494, 0.0
        %v1515 = vadd.f32 %v1513, %v1514
        %v1516 = vsel %vm600, %v1495, 0.0
        %v1517 = vadd.f32 %v1515, %v1516
        %v1518 = vsel %vm600, %v1496, 0.0
        %v1519 = vadd.f32 %v1517, %v1518
        %v1520 = vsel %vm600, %v1497, 0.0
        %v1521 = vadd.f32 %v1519, %v1520
        %v1522 = vsel %vm600, %v1498, 0.0
        %v1523 = vadd.f32 %v1521, %v1522
        %v1524 = vsel %vm600, %v1499, 0.0
        %v1525 = vadd.f32 %v1523, %v1524
        %v1526 = vsel %vm600, %v1500, 0.0
        %v1527 = vadd.f32 %v1525, %v1526
        %v1528 = vsel %vm600, %v1501, 0.0
        %v1529 = vadd.f32 %v1527, %v1528
        %v1530 = vsel %vm600, %v1502, 0.0
        %v1531 = vadd.f32 %v1529, %v1530
        %v1532 = vsel %vm600, %v1503, 0.0
        %v1533 = vadd.f32 %v1531, %v1532
        %v1534 = vsel %vm600, %v1504, 0.0
        %v1535 = vadd.f32 %v1533, %v1534
        %v1536 = vmul.f32 %v1535, %v1412
        %1538 = vrot.lane.b32.xlu0 %v1486, 64
        %v1539 = vpop.permute.xlu0 %1538
        %v1541 = vmul.f32 %v671, %v1539
        %1543 = vrot.lane.b32.xlu0 %v1541, 64
        %v1544 = vpop.permute.xlu0 %1543
        %v1546 = vadd.f32 %v1536, %v1544
        %s1547 = smul.u32 %s675, 8
        %s1548 = scalar_lea.vmem [#allocation12], %s1547
        %1549 = vst.msk [vmem:[%s1548] sm:$0xff] %vm600, %v952
        %1550 = vrot.lane.b32.xlu0 %v671, 64
        %v1551 = vpop.permute.xlu0 %1550
        %s1553 = scalar_lea.vmem [#allocation14], %s1547
        %1554 = vst.msk [vmem:[%s1553] sm:$0xff] %vm600, %v1551
        %v1555 = vld [vmem:[%s11] sm:$0x1]
        %v1556 = vld [vmem:[%s11 + $0x1] sm:$0x1]
        %v1557 = vld [vmem:[%s11 + $0x2] sm:$0x1]
        %v1558 = vld [vmem:[%s11 + $0x3] sm:$0x1]
        %v1559 = vld [vmem:[%s11 + $0x4] sm:$0x1]
        %v1560 = vld [vmem:[%s11 + $0x5] sm:$0x1]
        %v1561 = vld [vmem:[#allocation7] sm:$0xff]
        %v1562 = vld [vmem:[#allocation7 + $0x8] sm:$0xff]
        %v1563 = vld [vmem:[#allocation7 + $0x10] sm:$0xff]
        %v1564 = vld [vmem:[#allocation7 + $0x18] sm:$0xff]
        %v1565 = vlaneseq
        %v1566 = vshrl.u32 %v1565, 7
        %v1567 = vsub.s32 0, %v1566
        %v1568 = vrot.slane %v1555, %v1567
        %v1570 = vsel %vm600, %v1546, 0
        %1572 = vmatprep.subr.mxu0 0.0
        %1573 = vmatpush1.msra.mxu0 %v1561
        %1574 = vmatprep.subr.mxu0 0.0
        %1575 = vmatpush1.msra.mxu0 %v1562
        %1576 = vmatprep.subr.mxu0 0.0
        %1577 = vmatpush1.msra.mxu0 %v1563
        %1578 = vmatprep.subr.mxu0 0.0
        %1579 = vmatpush1.msra.mxu0 %v1564
        %1580 = vmatprep.subr.mxu0 0.0
        %1581 = vmatpush1.msra.mxu0 0.0
        %1582 = vmatprep.subr.mxu0 0.0
        %1583 = vmatpush1.msra.mxu0 0.0
        %1584 = vmatprep.subr.mxu0 0.0
        %1585 = vmatpush1.msra.mxu0 0.0
        %1586 = vmatprep.subr.mxu0 0.0
        %1587 = vmatpush1.msra.mxu0 0.0
        %1588 = vmatprep.subr.mxu0 0.0
        %1589 = vmatpush1.msra.mxu0 0.0
        %1590 = vmatprep.subr.mxu0 0.0
        %1591 = vmatpush1.msra.mxu0 0.0
        %1592 = vmatprep.subr.mxu0 0.0
        %1593 = vmatpush1.msra.mxu0 0.0
        %1594 = vmatprep.subr.mxu0 0.0
        %1595 = vmatpush1.msra.mxu0 0.0
        %1596 = vmatprep.subr.mxu0 0.0
        %1597 = vmatpush1.msra.mxu0 0.0
        %1598 = vmatprep.subr.mxu0 0.0
        %1599 = vmatpush1.msra.mxu0 0.0
        %1600 = vmatprep.subr.mxu0 0.0
        %1601 = vmatpush1.msra.mxu0 0.0
        %1602 = vmatprep.subr.mxu0 0.0
        %1603 = vmatpush1.msra.mxu0 0.0
        %1604 = vmatprep.subr.mxu0 0.0
        %1605 = vmatpush1.msra.mxu0 0.0
        %1606 = vmatprep.subr.mxu0 0.0
        %1607 = vmatpush1.msra.mxu0 0.0
        %1608 = vmatprep.subr.mxu0 0.0
        %1609 = vmatpush1.msra.mxu0 0.0
        %1610 = vmatprep.subr.mxu0 0.0
        %1611 = vmatpush1.msra.mxu0 0.0
        %1612 = vmatprep.subr.mxu0 0.0
        %1613 = vmatpush1.msra.mxu0 0.0
        %1614 = vmatprep.subr.mxu0 0.0
        %1615 = vmatpush1.msra.mxu0 0.0
        %1616 = vmatprep.subr.mxu0 0.0
        %1617 = vmatpush1.msra.mxu0 0.0
        %1618 = vmatprep.subr.mxu0 0.0
        %1619 = vmatpush1.msra.mxu0 0.0
        %1620 = vmatprep.subr.mxu0 0.0
        %1621 = vmatpush1.msra.mxu0 0.0
        %1622 = vmatprep.subr.mxu0 0.0
        %1623 = vmatpush1.msra.mxu0 0.0
        %1624 = vmatprep.subr.mxu0 0.0
        %1625 = vmatpush1.msra.mxu0 0.0
        %1626 = vmatprep.subr.mxu0 0.0
        %1627 = vmatpush1.msra.mxu0 0.0
        %1628 = vmatprep.subr.mxu0 0.0
        %1629 = vmatpush1.msra.mxu0 0.0
        %1630 = vmatprep.subr.mxu0 0.0
        %1631 = vmatpush1.msra.mxu0 0.0
        %1632 = vmatprep.subr.mxu0 0.0
        %1633 = vmatpush1.msra.mxu0 0.0
        %1634 = vmatprep.subr.mxu0 0.0
        %1635 = vmatpush1.msra.mxu0 0.0
        %1636 = vmatprep.mubr.f32.mxu0 0.0
        %1637 = vmatmul.mubr.f32.gmra.mrb[0].mxu0 %v1570
        %v1638 = vpop.f32.mrb[0].mxu0
        %v1639 = vadd.f32 %v1568, %v1638
        %v1640 = vpop.f32.mrb[0].mxu0
        %1641 = vdwg.mxu0
        %v1642 = vadd.f32 %v583, %v1639
        %v1643 = vsel %vm600, %v1642, 0.0
        %1644 = vadd.xlane.f32.xlu0 %v1643
        %v1645 = vpop.xlane.xlu0 %1644
        %v1646 = vrcp.pop 32.0
        %v1647 = vmul.f32 %v1645, %v1646
        %v1648 = vsub.f32 %v1642, %v1647
        %v1649 = vmul.f32 %v1648, %v1648
        %v1650 = vsel %vm600, %v1649, 0.0
        %1651 = vadd.xlane.f32.xlu0 %v1650
        %v1652 = vpop.xlane.xlu0 %1651
        %v1653 = vmul.f32 %v1652, %v1646
        %v1654 = vadd.f32 %v1653, 1e-05
        %v1655 = vrsqrt.pop %v1654
        %v1656 = vmul.f32 %v1648, %v1655
        %v1657 = vlaneseq
        %v1658 = vshrl.u32 %v1657, 7
        %v1659 = vsub.s32 0, %v1658
        %v1660 = vrot.slane %v1557, %v1659
        %v1661 = vmul.f32 %v1656, %v1660
        %v1662 = vlaneseq
        %v1663 = vshrl.u32 %v1662, 7
        %v1664 = vsub.s32 0, %v1663
        %v1665 = vrot.slane %v1558, %v1664
        %v1666 = vadd.f32 %v1661, %v1665
        %v1667 = vld [vmem:[#allocation8] sm:$0xff]
        %v1668 = vld [vmem:[#allocation8 + $0x8] sm:$0xff]
        %v1669 = vld [vmem:[#allocation8 + $0x10] sm:$0xff]
        %v1670 = vld [vmem:[#allocation8 + $0x18] sm:$0xff]
        %v1671 = vld [vmem:[#allocation10] sm:$0x1]
        %v1673 = vlaneseq
        %v1674 = vshrl.u32 %v1673, 7
        %v1675 = vsub.s32 0, %v1674
        %v1676 = vrot.slane %v1671, %v1675
        %v1679 = vsel %vm600, %v1666, 0
        %1681 = vmatprep.subr.mxu0 0.0
        %1682 = vmatpush1.msra.mxu0 %v1667
        %1683 = vmatprep.subr.mxu0 0.0
        %1684 = vmatpush1.msra.mxu0 %v1668
        %1685 = vmatprep.subr.mxu0 0.0
        %1686 = vmatpush1.msra.mxu0 %v1669
        %1687 = vmatprep.subr.mxu0 0.0
        %1688 = vmatpush1.msra.mxu0 %v1670
        %1689 = vmatprep.subr.mxu0 0.0
        %1690 = vmatpush1.msra.mxu0 0.0
        %1691 = vmatprep.subr.mxu0 0.0
        %1692 = vmatpush1.msra.mxu0 0.0
        %1693 = vmatprep.subr.mxu0 0.0
        %1694 = vmatpush1.msra.mxu0 0.0
        %1695 = vmatprep.subr.mxu0 0.0
        %1696 = vmatpush1.msra.mxu0 0.0
        %1697 = vmatprep.subr.mxu0 0.0
        %1698 = vmatpush1.msra.mxu0 0.0
        %1699 = vmatprep.subr.mxu0 0.0
        %1700 = vmatpush1.msra.mxu0 0.0
        %1701 = vmatprep.subr.mxu0 0.0
        %1702 = vmatpush1.msra.mxu0 0.0
        %1703 = vmatprep.subr.mxu0 0.0
        %1704 = vmatpush1.msra.mxu0 0.0
        %1705 = vmatprep.subr.mxu0 0.0
        %1706 = vmatpush1.msra.mxu0 0.0
        %1707 = vmatprep.subr.mxu0 0.0
        %1708 = vmatpush1.msra.mxu0 0.0
        %1709 = vmatprep.subr.mxu0 0.0
        %1710 = vmatpush1.msra.mxu0 0.0
        %1711 = vmatprep.subr.mxu0 0.0
        %1712 = vmatpush1.msra.mxu0 0.0
        %1713 = vmatprep.subr.mxu0 0.0
        %1714 = vmatpush1.msra.mxu0 0.0
        %1715 = vmatprep.subr.mxu0 0.0
        %1716 = vmatpush1.msra.mxu0 0.0
        %1717 = vmatprep.subr.mxu0 0.0
        %1718 = vmatpush1.msra.mxu0 0.0
        %1719 = vmatprep.subr.mxu0 0.0
        %1720 = vmatpush1.msra.mxu0 0.0
        %1721 = vmatprep.subr.mxu0 0.0
        %1722 = vmatpush1.msra.mxu0 0.0
        %1723 = vmatprep.subr.mxu0 0.0
        %1724 = vmatpush1.msra.mxu0 0.0
        %1725 = vmatprep.subr.mxu0 0.0
        %1726 = vmatpush1.msra.mxu0 0.0
        %1727 = vmatprep.subr.mxu0 0.0
        %1728 = vmatpush1.msra.mxu0 0.0
        %1729 = vmatprep.subr.mxu0 0.0
        %1730 = vmatpush1.msra.mxu0 0.0
        %1731 = vmatprep.subr.mxu0 0.0
        %1732 = vmatpush1.msra.mxu0 0.0
        %1733 = vmatprep.subr.mxu0 0.0
        %1734 = vmatpush1.msra.mxu0 0.0
        %1735 = vmatprep.subr.mxu0 0.0
        %1736 = vmatpush1.msra.mxu0 0.0
        %1737 = vmatprep.subr.mxu0 0.0
        %1738 = vmatpush1.msra.mxu0 0.0
        %1739 = vmatprep.subr.mxu0 0.0
        %1740 = vmatpush1.msra.mxu0 0.0
        %1741 = vmatprep.subr.mxu0 0.0
        %1742 = vmatpush1.msra.mxu0 0.0
        %1743 = vmatprep.subr.mxu0 0.0
        %1744 = vmatpush1.msra.mxu0 0.0
        %1745 = vmatprep.mubr.f32.mxu0 0.0
        %1746 = vmatmul.mubr.f32.gmra.mrb[0].mxu0 %v1679
        %v1747 = vpop.f32.mrb[0].mxu0
        %v1748 = vadd.f32 %v1676, %v1747
        %v1749 = vpop.f32.mrb[0].mxu0
        %1750 = vdwg.mxu0
        %v1751 = vmax.f32 %v1748, 0.0
        %v1752 = vld [vmem:[%s10] sm:$0xff]
        %v1753 = vld [vmem:[%s10 + $0x8] sm:$0xff]
        %v1754 = vld [vmem:[%s10 + $0x10] sm:$0xff]
        %v1755 = vld [vmem:[%s10 + $0x18] sm:$0xff]
        %v1756 = vld [vmem:[%s10 + $0x20] sm:$0xff]
        %v1757 = vld [vmem:[%s10 + $0x28] sm:$0xff]
        %v1758 = vld [vmem:[%s10 + $0x30] sm:$0xff]
        %v1759 = vld [vmem:[%s10 + $0x38] sm:$0xff]
        %v1760 = vld [vmem:[%s10 + $0x40] sm:$0xff]
        %v1761 = vld [vmem:[%s10 + $0x48] sm:$0xff]
        %v1762 = vld [vmem:[%s10 + $0x50] sm:$0xff]
        %v1763 = vld [vmem:[%s10 + $0x58] sm:$0xff]
        %v1764 = vld [vmem:[%s10 + $0x60] sm:$0xff]
        %v1765 = vld [vmem:[%s10 + $0x68] sm:$0xff]
        %v1766 = vld [vmem:[%s10 + $0x70] sm:$0xff]
        %v1767 = vld [vmem:[%s10 + $0x78] sm:$0xff]
        %v1768 = vlaneseq
        %v1769 = vshrl.u32 %v1768, 7
        %v1770 = vsub.s32 0, %v1769
        %v1771 = vrot.slane %v1556, %v1770
        %1772 = vmatprep.subr.mxu0 0.0
        %1773 = vmatpush1.msra.mxu0 %v1752
        %1774 = vmatprep.subr.mxu0 0.0
        %1775 = vmatpush1.msra.mxu0 %v1753
        %1776 = vmatprep.subr.mxu0 0.0
        %1777 = vmatpush1.msra.mxu0 %v1754
        %1778 = vmatprep.subr.mxu0 0.0
        %1779 = vmatpush1.msra.mxu0 %v1755
        %1780 = vmatprep.subr.mxu0 0.0
        %1781 = vmatpush1.msra.mxu0 %v1756
        %1782 = vmatprep.subr.mxu0 0.0
        %1783 = vmatpush1.msra.mxu0 %v1757
        %1784 = vmatprep.subr.mxu0 0.0
        %1785 = vmatpush1.msra.mxu0 %v1758
        %1786 = vmatprep.subr.mxu0 0.0
        %1787 = vmatpush1.msra.mxu0 %v1759
        %1788 = vmatprep.subr.mxu0 0.0
        %1789 = vmatpush1.msra.mxu0 %v1760
        %1790 = vmatprep.subr.mxu0 0.0
        %1791 = vmatpush1.msra.mxu0 %v1761
        %1792 = vmatprep.subr.mxu0 0.0
        %1793 = vmatpush1.msra.mxu0 %v1762
        %1794 = vmatprep.subr.mxu0 0.0
        %1795 = vmatpush1.msra.mxu0 %v1763
        %1796 = vmatprep.subr.mxu0 0.0
        %1797 = vmatpush1.msra.mxu0 %v1764
        %1798 = vmatprep.subr.mxu0 0.0
        %1799 = vmatpush1.msra.mxu0 %v1765
        %1800 = vmatprep.subr.mxu0 0.0
        %1801 = vmatpush1.msra.mxu0 %v1766
        %1802 = vmatprep.subr.mxu0 0.0
        %1803 = vmatpush1.msra.mxu0 %v1767
        %1804 = vmatprep.subr.mxu0 0.0
        %1805 = vmatpush1.msra.mxu0 0.0
        %1806 = vmatprep.subr.mxu0 0.0
        %1807 = vmatpush1.msra.mxu0 0.0
        %1808 = vmatprep.subr.mxu0 0.0
        %1809 = vmatpush1.msra.mxu0 0.0
        %1810 = vmatprep.subr.mxu0 0.0
        %1811 = vmatpush1.msra.mxu0 0.0
        %1812 = vmatprep.subr.mxu0 0.0
        %1813 = vmatpush1.msra.mxu0 0.0
        %1814 = vmatprep.subr.mxu0 0.0
        %1815 = vmatpush1.msra.mxu0 0.0
        %1816 = vmatprep.subr.mxu0 0.0
        %1817 = vmatpush1.msra.mxu0 0.0
        %1818 = vmatprep.subr.mxu0 0.0
        %1819 = vmatpush1.msra.mxu0 0.0
        %1820 = vmatprep.subr.mxu0 0.0
        %1821 = vmatpush1.msra.mxu0 0.0
        %1822 = vmatprep.subr.mxu0 0.0
        %1823 = vmatpush1.msra.mxu0 0.0
        %1824 = vmatprep.subr.mxu0 0.0
        %1825 = vmatpush1.msra.mxu0 0.0
        %1826 = vmatprep.subr.mxu0 0.0
        %1827 = vmatpush1.msra.mxu0 0.0
        %1828 = vmatprep.subr.mxu0 0.0
        %1829 = vmatpush1.msra.mxu0 0.0
        %1830 = vmatprep.subr.mxu0 0.0
        %1831 = vmatpush1.msra.mxu0 0.0
        %1832 = vmatprep.subr.mxu0 0.0
        %1833 = vmatpush1.msra.mxu0 0.0
        %1834 = vmatprep.subr.mxu0 0.0
        %1835 = vmatpush1.msra.mxu0 0.0
        %1836 = vmatprep.mubr.f32.mxu0 0.0
        %1837 = vmatmul.mubr.f32.gmra.mrb[0].mxu0 %v1751
        %v1838 = vpop.f32.mrb[0].mxu0
        %v1839 = vadd.f32 %v1771, %v1838
        %v1840 = vpop.f32.mrb[0].mxu0
        %1841 = vdwg.mxu0
        %v1842 = vadd.f32 %v1666, %v1839
        %v1843 = vsel %vm600, %v1842, 0.0
        %1844 = vadd.xlane.f32.xlu0 %v1843
        %v1845 = vpop.xlane.xlu0 %1844
        %v1846 = vmul.f32 %v1845, %v1646
        %v1847 = vsub.f32 %v1842, %v1846
        %v1848 = vmul.f32 %v1847, %v1847
        %v1849 = vsel %vm600, %v1848, 0.0
        %1850 = vadd.xlane.f32.xlu0 %v1849
        %v1851 = vpop.xlane.xlu0 %1850
        %v1852 = vmul.f32 %v1851, %v1646
        %v1853 = vadd.f32 %v1852, 1e-05
        %v1854 = vrsqrt.pop %v1853
        %v1855 = vmul.f32 %v1847, %v1854
        %v1856 = vlaneseq
        %v1857 = vshrl.u32 %v1856, 7
        %v1858 = vsub.s32 0, %v1857
        %v1859 = vrot.slane %v1559, %v1858
        %v1860 = vmul.f32 %v1855, %v1859
        %v1861 = vlaneseq
        %v1862 = vshrl.u32 %v1861, 7
        %v1863 = vsub.s32 0, %v1862
        %v1864 = vrot.slane %v1560, %v1863
        %v1865 = vadd.f32 %v1860, %v1864
        %1866 = vst.msk [vmem:[%s519] sm:$0xff] %vm600, %v1865
        %s1867 = sand.u32 %s298, 1
        %s1868 = scalar_lea.sflag [#allocation4], %s1867
        %s1869 = sand.u32 %s298, 1
        %s1870 = smul.addr %s1869, 8
        %s1871 = scalar_lea.vmem [#allocation11], %s1870
        // Predicated region
        $region93: #{tpu_custom_call.1} parent=67 // pred_check
          %p1872 = pneg %p308
        $region94: #{tpu_custom_call.1} parent=67 // pred_check_branch
          %1874 = sbr.rel (%p1872) target = $region96
        $region95: #{tpu_custom_call.1} parent=67 // pred_region
          %s1876 = ssub.s32 128, 128
          %1877 = vsyncadd %s1868, %s1876
          %s1878 = smul.addr %s33, 128
          %s1879 = scalar_lea.hbm %s12, %s1878
          %s1881 = sshll.u32 %s1871, 4
          %s1882 = int_to_ptr.vmem [resolvable:$true] %s1881
          %1884 = dma.vmem_to_hbm [thread:$0]  %s1882, 128, %s1879, %s1868
        $region96: #{tpu_custom_call.1} parent=67 // pred_fallthru
          _
        // Predicated region
        $region97: #{tpu_custom_call.1} parent=67 // pred_check
          %p1885 = pneg %p329
        $region98: #{tpu_custom_call.1} parent=67 // pred_check_branch
          %1887 = sbr.rel (%p1885) target = $region100
        $region99: #{tpu_custom_call.1} parent=67 // pred_region
          %s1889 = ssub.s32 2048, 2048
          %1890 = vsyncadd [#allocation13], %s1889
          %s1891 = sshll.u32 [#allocation12], 4
          %s1892 = int_to_ptr.vmem [resolvable:$true] %s1891
          %1897 = dma.vmem_to_hbm [thread:$0]  %s1892, 2048, %s13, [#allocation13], 128, 128, 8
        $region100: #{tpu_custom_call.1} parent=67 // pred_fallthru
          _
        // Predicated region
        $region101: #{tpu_custom_call.1} parent=67 // pred_check
          %p1898 = pneg %p350
        $region102: #{tpu_custom_call.1} parent=67 // pred_check_branch
          %1900 = sbr.rel (%p1898) target = $region104
        $region103: #{tpu_custom_call.1} parent=67 // pred_region
          %s1902 = ssub.s32 2048, 2048
          %1903 = vsyncadd [#allocation13], %s1902
          %s1904 = sshll.u32 [#allocation14], 4
          %s1905 = int_to_ptr.vmem [resolvable:$true] %s1904
          %1910 = dma.vmem_to_hbm [thread:$0]  %s1905, 2048, %s14, [#allocation13], 128, 128, 8
        $region104: #{tpu_custom_call.1} parent=67 // pred_fallthru
          _
        // Predicated region
        $region105: #{tpu_custom_call.1} parent=67 // pred_check
          %p1911 = pneg %p329
        $region106: #{tpu_custom_call.1} parent=67 // pred_check_branch
          %1913 = sbr.rel (%p1911) target = $region108
        $region107: #{tpu_custom_call.1} parent=67 // pred_region
          %1914 = dma.done [#allocation13], 2048
        $region108: #{tpu_custom_call.1} parent=67 // pred_fallthru
          _
        // Predicated region
        $region109: #{tpu_custom_call.1} parent=67 // pred_check
          %p1915 = pneg %p350
        $region110: #{tpu_custom_call.1} parent=67 // pred_check_branch
          %1917 = sbr.rel (%p1915) target = $region112
        $region111: #{tpu_custom_call.1} parent=67 // pred_region
          %1918 = dma.done [#allocation13], 2048
        $region112: #{tpu_custom_call.1} parent=67 // pred_fallthru
          _
      $region68: #{tpu_custom_call.1} parent=5 // pred_fallthru
        _
      %p1919 = scmp.le.s32.totalorder 2, %s28
      // Predicated region
      $region113: #{tpu_custom_call.1} parent=5 // pred_check
        %p1920 = pneg %p1919
      $region114: #{tpu_custom_call.1} parent=5 // pred_check_branch
        %1922 = sbr.rel (%p1920) target = $region116
      $region115: #{tpu_custom_call.1} parent=5 // pred_region
        %s1923 = ssub.s32 %s28, 2
        // Predicated region
        $region117: #{tpu_custom_call.1} parent=115 // pred_check
          %p1924 = pneg %p314
        $region118: #{tpu_custom_call.1} parent=115 // pred_check_branch
          %1926 = sbr.rel (%p1924) target = $region120
        $region119: #{tpu_custom_call.1} parent=115 // pred_region
          %s1927 = sand.u32 %s299, 1
          %s1928 = scalar_lea.sflag [#allocation4], %s1927
          %s1929 = sand.u32 %s299, 1
          %s1930 = smul.addr %s1929, 8
          %s1931 = scalar_lea.vmem [#allocation11], %s1930
          %1932 = dma.done %s1928, 128
        $region120: #{tpu_custom_call.1} parent=115 // pred_fallthru
          _
      $region116: #{tpu_custom_call.1} parent=5 // pred_fallthru
        _
    $region6: #{tpu_custom_call.1} parent=1 // loop_footer
      %s32 = sadd.s32 1, %s28
    $region7: #{tpu_custom_call.1} parent=1 // loop_footer_branch
      %27 = sbr.rel target = $region3
    $region8: #{tpu_custom_call.1} parent=1 // loop_exit
      _
    %1933 = vsyncpa [#allocation3], 1
    %s1934 = scalar_lea.sflag [#allocation3], 1
    %1935 = vsyncpa %s1934, 1
    %1936 = vsyncpa [#allocation6], 1
    %1937 = vsyncpa [#allocation9], 1
    %1938 = vsyncpa [#allocation4], 1
    %s1939 = scalar_lea.sflag [#allocation4], 1
    %1940 = vsyncpa %s1939, 1
    %1941 = vsyncpa [#allocation13], 1

</llo_original>
